<compile_context>
chip_gen: v5e
topology: v5e:2x2
jax: 0.10.0
libtpu: 0.0.40
codegen_flags: <defaults>
</compile_context>

<pallas_src>
import math

import jax
import jax.numpy as jnp
from jax import lax
from jax.experimental import pallas as pl
from jax.experimental.pallas import tpu as pltpu

# ----------------------------- synthetic config -----------------------------
B, S = 2, 8              # batch, sequence length
HIDDEN = 32              # stand-in for 768
HEADS = 2
HEAD_DIM = HIDDEN // HEADS
FFN = 64                 # stand-in for 3072
LAYERS = 2               # stand-in for 12
VOCAB = 30
TYPE_VOCAB = 2
MAX_POS = 16
WORD_SIZE = 16           # setting.word_size (300 in the original)
OUT_PAD = 128            # lane-dense output width (>= 128-lane vreg)
LN_EPS = 1e-12           # BERT layernorm eps
ATT_SCALE = 1.0 / math.sqrt(HEAD_DIM)


def _vmem():
    return pl.BlockSpec(memory_space=pltpu.MemorySpace.VMEM)


# ------------------------------ in-kernel helpers ----------------------------
def _layernorm(x, g, b):
    mean = jnp.mean(x, axis=-1, keepdims=True)
    xc = x - mean
    var = jnp.mean(xc * xc, axis=-1, keepdims=True)
    return xc * lax.rsqrt(var + LN_EPS) * g + b


def _gelu(x):
    # tanh-approx GELU (HF BERT uses erf-GELU; difference is negligible and
    # tanh maps onto the EUP slot).
    c = jnp.asarray(math.sqrt(2.0 / math.pi), x.dtype)
    return 0.5 * x * (1.0 + jnp.tanh(c * (x + 0.044715 * x * x * x)))


# ------------------------------- fused kernel --------------------------------
def _fused_bert_kernel(
        emb_ref, bias_ref,
        emb_ln_g_ref, emb_ln_b_ref,
        wqkv_ref, bqkv_ref, wo_ref, bo_ref,
        ln1_g_ref, ln1_b_ref,
        w1_ref, b1_ref, w2_ref, b2_ref,
        ln2_g_ref, ln2_b_ref,
        wp_ref, bp_ref, ww_ref, bw_ref,
        word_ref, pool_ref,
        ctx_ref):
    """Whole Bert_Word forward in one kernel.

    emb:  (B*S, H) summed word+pos+type embeddings
    bias: (B, 1, S) additive attention-mask bias
    word_ref: (B*S, OUT_PAD) lane-dense ReLU(word projection), cols >=WORD_SIZE are pad
    pool_ref: (B, OUT_PAD)  lane-dense tanh pooler,            cols >=HIDDEN   are pad
    ctx_ref:  (B*S, H) VMEM scratch for the merged attention context
    """
    # ---- embedding LayerNorm (no dummy residual) ----
    x = _layernorm(emb_ref[...], emb_ln_g_ref[...], emb_ln_b_ref[...])   # (B*S, H)

    # ---- encoder layers (unrolled, weights stacked on a leading L axis) ----
    for l in range(LAYERS):
        # fused QKV projection: one MXU pass over (B*S, 3H)
        qkv = jnp.dot(x, wqkv_ref[l],
                      preferred_element_type=jnp.float32) + bqkv_ref[l]

        # attention: per (batch, head) blocks via static in-VMEM slices
        for b in range(B):
            r0 = b * S
            bias_b = bias_ref[b]                       # (1, S), broadcasts over queries
            for h in range(HEADS):
                c0 = h * HEAD_DIM
                qh = qkv[r0:r0 + S, c0:c0 + HEAD_DIM]
                kh = qkv[r0:r0 + S, HIDDEN + c0:HIDDEN + c0 + HEAD_DIM]
                vh = qkv[r0:r0 + S, 2 * HIDDEN + c0:2 * HIDDEN + c0 + HEAD_DIM]

                s = lax.dot_general(qh, kh, (((1,), (1,)), ((), ())),
                                    preferred_element_type=jnp.float32)   # (S, S)
                s = s * ATT_SCALE + bias_b
                s = s - jnp.max(s, axis=-1, keepdims=True)
                p = jnp.exp(s)
                p = p * pl.reciprocal(jnp.sum(p, axis=-1, keepdims=True),
                                      approx=True)
                ctx_ref[pl.ds(r0, S), pl.ds(c0, HEAD_DIM)] = jnp.dot(
                    p, vh, preferred_element_type=jnp.float32)

        attn_out = jnp.dot(ctx_ref[...], wo_ref[l],
                           preferred_element_type=jnp.float32) + bo_ref[l]
        x = _layernorm(attn_out + x, ln1_g_ref[l], ln1_b_ref[l])

        hmid = _gelu(jnp.dot(x, w1_ref[l],
                             preferred_element_type=jnp.float32) + b1_ref[l])
        ffn_out = jnp.dot(hmid, w2_ref[l],
                          preferred_element_type=jnp.float32) + b2_ref[l]
        x = _layernorm(ffn_out + x, ln2_g_ref[l], ln2_b_ref[l])

    # ---- word projection + ReLU (lane-dense, padded to OUT_PAD columns) ----
    # TODO(synk): nn.Dropout is identity in eval mode; training-mode dropout
    # would use pltpu.prng_seed / pltpu.stateful_bernoulli here.
    word = jnp.dot(x, ww_ref[...],
                   preferred_element_type=jnp.float32) + bw_ref[...]
    word_ref[...] = jnp.maximum(word, 0.0)

    # ---- pooler: dense + tanh on the [CLS] token of each sequence ----
    for b in range(B):
        cls_b = x[b * S:b * S + 1, :]                                     # (1, H)
        pool_b = jnp.tanh(jnp.dot(cls_b, wp_ref[...],
                                  preferred_element_type=jnp.float32) + bp_ref[...])
        pool_ref[pl.ds(b, 1), :] = pool_b


# ------------------------------ parameter init -------------------------------
def init_params(key):
    def nrm(k, shape):
        return jax.random.normal(k, shape, jnp.float32) * 0.02

    keys = iter(jax.random.split(key, 16))
    return {
        "word_emb": nrm(next(keys), (VOCAB, HIDDEN)),
        "pos_emb": nrm(next(keys), (MAX_POS, HIDDEN)),
        "type_emb": nrm(next(keys), (TYPE_VOCAB, HIDDEN)),
        "emb_ln_g": jnp.ones((1, HIDDEN), jnp.float32),
        "emb_ln_b": jnp.zeros((1, HIDDEN), jnp.float32),
        # encoder layers: stacked on a leading L axis, QKV fused to (H, 3H)
        "wqkv": nrm(next(keys), (LAYERS, HIDDEN, 3 * HIDDEN)),
        "bqkv": jnp.zeros((LAYERS, 1, 3 * HIDDEN), jnp.float32),
        "wo": nrm(next(keys), (LAYERS, HIDDEN, HIDDEN)),
        "bo": jnp.zeros((LAYERS, 1, HIDDEN), jnp.float32),
        "ln1_g": jnp.ones((LAYERS, 1, HIDDEN), jnp.float32),
        "ln1_b": jnp.zeros((LAYERS, 1, HIDDEN), jnp.float32),
        "w1": nrm(next(keys), (LAYERS, HIDDEN, FFN)),
        "b1": jnp.zeros((LAYERS, 1, FFN), jnp.float32),
        "w2": nrm(next(keys), (LAYERS, FFN, HIDDEN)),
        "b2": jnp.zeros((LAYERS, 1, HIDDEN), jnp.float32),
        "ln2_g": jnp.ones((LAYERS, 1, HIDDEN), jnp.float32),
        "ln2_b": jnp.zeros((LAYERS, 1, HIDDEN), jnp.float32),
        # pooler dense + wordto300
        "wp": nrm(next(keys), (HIDDEN, HIDDEN)),
        "bp": jnp.zeros((1, HIDDEN), jnp.float32),
        "w_word": nrm(next(keys), (HIDDEN, WORD_SIZE)),
        "b_word": jnp.zeros((1, WORD_SIZE), jnp.float32),
    }


# --------------------------------- forward -----------------------------------
def bert_word_forward(params, text_id, attention_mask):
    # embedding gathers are XLA glue (data-dependent gather); sum done here too
    we = params["word_emb"][text_id]                              # (B,S,H)
    pe = params["pos_emb"][jnp.arange(S)][None, :, :]             # (1,S,H)
    te = params["type_emb"][jnp.zeros((B, S), jnp.int32)]         # (B,S,H)
    emb = (we + pe + te).reshape(B * S, HIDDEN)

    # additive attention-mask bias, broadcast over heads/queries inside kernel
    bias = ((1.0 - attention_mask.astype(jnp.float32)) * -10000.0
            ).reshape(B, 1, S)

    # zero-pad pooler / word-projection weights to a lane-dense 128-wide slab
    wp_pad = jnp.zeros((HIDDEN, OUT_PAD), jnp.float32).at[:, :HIDDEN].set(params["wp"])
    bp_pad = jnp.zeros((1, OUT_PAD), jnp.float32).at[:, :HIDDEN].set(params["bp"])
    ww_pad = jnp.zeros((HIDDEN, OUT_PAD), jnp.float32).at[:, :WORD_SIZE].set(params["w_word"])
    bw_pad = jnp.zeros((1, OUT_PAD), jnp.float32).at[:, :WORD_SIZE].set(params["b_word"])

    word_pad, pool_pad = pl.pallas_call(
        _fused_bert_kernel,
        out_shape=(jax.ShapeDtypeStruct((B * S, OUT_PAD), jnp.float32),
                   jax.ShapeDtypeStruct((B, OUT_PAD), jnp.float32)),
        in_specs=[_vmem()] * 20,
        out_specs=(_vmem(), _vmem()),
        scratch_shapes=[pltpu.VMEM((B * S, HIDDEN), jnp.float32)],
    )(emb, bias,
      params["emb_ln_g"], params["emb_ln_b"],
      params["wqkv"], params["bqkv"], params["wo"], params["bo"],
      params["ln1_g"], params["ln1_b"],
      params["w1"], params["b1"], params["w2"], params["b2"],
      params["ln2_g"], params["ln2_b"],
      wp_pad, bp_pad, ww_pad, bw_pad)

    word = word_pad[:, :WORD_SIZE].reshape(B, S, WORD_SIZE)
    pooler_output = pool_pad[:, :HIDDEN]
    return word, pooler_output


# ----------------------------------- main -------------------------------------
if __name__ == "__main__":
    key = jax.random.PRNGKey(0)
    k_param, k_ids = jax.random.split(key)

    params = init_params(k_param)
    text_id = jax.random.randint(k_ids, (B, S), 0, VOCAB, dtype=jnp.int32)
    attention_mask = jnp.ones((B, S), jnp.int32).at[1, S - 2:].set(0)

    fwd = jax.jit(bert_word_forward)
    last_hidden_proj, pooler_out = fwd(params, text_id, attention_mask)
    jax.block_until_ready((last_hidden_proj, pooler_out))

    assert last_hidden_proj.shape == (B, S, WORD_SIZE)
    assert pooler_out.shape == (B, HIDDEN)
    assert bool(jnp.all(jnp.isfinite(last_hidden_proj)))
    assert bool(jnp.all(jnp.isfinite(pooler_out)))
    print("KERNEL_OK")
</pallas_src>

<mosaic_0001>
module attributes {stable_mosaic.version = 11 : i64} {
  func.func @_fused_bert_kernel(%arg0: memref<16x32xf32, #tpu.memory_space<vmem>>, %arg1: memref<2x1x8xf32, #tpu.memory_space<vmem>>, %arg2: memref<1x32xf32, #tpu.memory_space<vmem>>, %arg3: memref<1x32xf32, #tpu.memory_space<vmem>>, %arg4: memref<2x32x96xf32, #tpu.memory_space<vmem>>, %arg5: memref<2x1x96xf32, #tpu.memory_space<vmem>>, %arg6: memref<2x32x32xf32, #tpu.memory_space<vmem>>, %arg7: memref<2x1x32xf32, #tpu.memory_space<vmem>>, %arg8: memref<2x1x32xf32, #tpu.memory_space<vmem>>, %arg9: memref<2x1x32xf32, #tpu.memory_space<vmem>>, %arg10: memref<2x32x64xf32, #tpu.memory_space<vmem>>, %arg11: memref<2x1x64xf32, #tpu.memory_space<vmem>>, %arg12: memref<2x64x32xf32, #tpu.memory_space<vmem>>, %arg13: memref<2x1x32xf32, #tpu.memory_space<vmem>>, %arg14: memref<2x1x32xf32, #tpu.memory_space<vmem>>, %arg15: memref<2x1x32xf32, #tpu.memory_space<vmem>>, %arg16: memref<32x128xf32, #tpu.memory_space<vmem>>, %arg17: memref<1x128xf32, #tpu.memory_space<vmem>>, %arg18: memref<32x128xf32, #tpu.memory_space<vmem>>, %arg19: memref<1x128xf32, #tpu.memory_space<vmem>>, %arg20: memref<16x128xf32, #tpu.memory_space<vmem>>, %arg21: memref<2x128xf32, #tpu.memory_space<vmem>>, %arg22: memref<16x32xf32, #tpu.memory_space<vmem>>) attributes {dimension_semantics = [], scalar_prefetch = 0 : i64, scratch_operands = 1 : i64, tpu.core_type = #tpu.core_type<tc>} {
    %c0 = arith.constant 0 : index
    %c0_0 = arith.constant 0 : index
    %0 = vector.load %arg0[%c0, %c0_0] : memref<16x32xf32, #tpu.memory_space<vmem>>, vector<16x32xf32>
    %c0_1 = arith.constant 0 : index
    %c0_2 = arith.constant 0 : index
    %1 = vector.load %arg2[%c0_1, %c0_2] : memref<1x32xf32, #tpu.memory_space<vmem>>, vector<1x32xf32>
    %c0_3 = arith.constant 0 : index
    %c0_4 = arith.constant 0 : index
    %2 = vector.load %arg3[%c0_3, %c0_4] : memref<1x32xf32, #tpu.memory_space<vmem>>, vector<1x32xf32>
    %cst = arith.constant dense<0.000000e+00> : vector<16xf32>
    %3 = vector.multi_reduction <add>, %0, %cst [1] : vector<16x32xf32> to vector<16xf32>
    %4 = vector.shape_cast %3 : vector<16xf32> to vector<16x1xf32>
    %cst_5 = arith.constant 3.200000e+01 : f32
    %5 = vector.broadcast %cst_5 : f32 to vector<16x1xf32>
    %6 = arith.divf %4, %5 : vector<16x1xf32>
    %7 = vector.broadcast %6 : vector<16x1xf32> to vector<16x32xf32>
    %8 = arith.subf %0, %7 : vector<16x32xf32>
    %9 = arith.mulf %8, %8 : vector<16x32xf32>
    %cst_6 = arith.constant dense<0.000000e+00> : vector<16xf32>
    %10 = vector.multi_reduction <add>, %9, %cst_6 [1] : vector<16x32xf32> to vector<16xf32>
    %11 = vector.shape_cast %10 : vector<16xf32> to vector<16x1xf32>
    %cst_7 = arith.constant 3.200000e+01 : f32
    %12 = vector.broadcast %cst_7 : f32 to vector<16x1xf32>
    %13 = arith.divf %11, %12 : vector<16x1xf32>
    %cst_8 = arith.constant 9.99999996E-13 : f32
    %14 = vector.broadcast %cst_8 : f32 to vector<16x1xf32>
    %15 = arith.addf %13, %14 : vector<16x1xf32>
    %16 = math.rsqrt %15 : vector<16x1xf32>
    %17 = vector.broadcast %16 : vector<16x1xf32> to vector<16x32xf32>
    %18 = arith.mulf %8, %17 : vector<16x32xf32>
    %19 = vector.broadcast %1 : vector<1x32xf32> to vector<16x32xf32>
    %20 = arith.mulf %18, %19 : vector<16x32xf32>
    %21 = vector.broadcast %2 : vector<1x32xf32> to vector<16x32xf32>
    %22 = arith.addf %20, %21 : vector<16x32xf32>
    %c0_9 = arith.constant 0 : index
    %c0_10 = arith.constant 0 : index
    %c0_11 = arith.constant 0 : index
    %23 = vector.load %arg4[%c0_9, %c0_10, %c0_11] : memref<2x32x96xf32, #tpu.memory_space<vmem>>, vector<1x32x96xf32>
    %24 = vector.shape_cast %23 : vector<1x32x96xf32> to vector<32x96xf32>
    %cst_12 = arith.constant dense<0.000000e+00> : vector<16x96xf32>
    %25 = tpu.matmul %22, %24, %cst_12 {dimension_numbers = #tpu.dot_dimension_numbers<[1], [0], [0], [1], [0, 0, 1, 1], [], []>} : vector<16x32xf32>, vector<32x96xf32>, vector<16x96xf32> -> vector<16x96xf32>
    %c0_13 = arith.constant 0 : index
    %c0_14 = arith.constant 0 : index
    %c0_15 = arith.constant 0 : index
    %26 = vector.load %arg5[%c0_13, %c0_14, %c0_15] : memref<2x1x96xf32, #tpu.memory_space<vmem>>, vector<1x1x96xf32>
    %27 = vector.shape_cast %26 : vector<1x1x96xf32> to vector<1x96xf32>
    %28 = vector.broadcast %27 : vector<1x96xf32> to vector<16x96xf32>
    %29 = arith.addf %25, %28 : vector<16x96xf32>
    %c0_16 = arith.constant 0 : index
    %c0_17 = arith.constant 0 : index
    %c0_18 = arith.constant 0 : index
    %30 = vector.load %arg1[%c0_16, %c0_17, %c0_18] : memref<2x1x8xf32, #tpu.memory_space<vmem>>, vector<1x1x8xf32>
    %31 = vector.shape_cast %30 : vector<1x1x8xf32> to vector<1x8xf32>
    %32 = vector.extract_strided_slice %29 {offsets = [0, 0], sizes = [8, 16], strides = [1, 1]} : vector<16x96xf32> to vector<8x16xf32>
    %33 = vector.extract_strided_slice %29 {offsets = [0, 32], sizes = [8, 16], strides = [1, 1]} : vector<16x96xf32> to vector<8x16xf32>
    %34 = vector.extract_strided_slice %29 {offsets = [0, 64], sizes = [8, 16], strides = [1, 1]} : vector<16x96xf32> to vector<8x16xf32>
    %cst_19 = arith.constant dense<0.000000e+00> : vector<8x8xf32>
    %35 = tpu.matmul %32, %33, %cst_19 {dimension_numbers = #tpu.dot_dimension_numbers<[1], [1], [0], [0], [0, 0, 1, 0], [], []>} : vector<8x16xf32>, vector<8x16xf32>, vector<8x8xf32> -> vector<8x8xf32>
    %cst_20 = arith.constant 2.500000e-01 : f32
    %36 = vector.broadcast %cst_20 : f32 to vector<8x8xf32>
    %37 = arith.mulf %35, %36 : vector<8x8xf32>
    %38 = vector.broadcast %31 : vector<1x8xf32> to vector<8x8xf32>
    %39 = arith.addf %37, %38 : vector<8x8xf32>
    %cst_21 = arith.constant dense<0xFF800000> : vector<8xf32>
    %40 = vector.multi_reduction <maximumf>, %39, %cst_21 [1] : vector<8x8xf32> to vector<8xf32>
    %41 = vector.shape_cast %40 : vector<8xf32> to vector<8x1xf32>
    %42 = vector.broadcast %41 : vector<8x1xf32> to vector<8x8xf32>
    %43 = arith.subf %39, %42 : vector<8x8xf32>
    %44 = math.exp %43 : vector<8x8xf32>
    %cst_22 = arith.constant dense<0.000000e+00> : vector<8xf32>
    %45 = vector.multi_reduction <add>, %44, %cst_22 [1] : vector<8x8xf32> to vector<8xf32>
    %46 = vector.shape_cast %45 : vector<8xf32> to vector<8x1xf32>
    %47 = tpu.reciprocal %46 {approx = true} : vector<8x1xf32> -> vector<8x1xf32>
    %48 = vector.broadcast %47 : vector<8x1xf32> to vector<8x8xf32>
    %49 = arith.mulf %44, %48 : vector<8x8xf32>
    %cst_23 = arith.constant dense<0.000000e+00> : vector<8x16xf32>
    %50 = tpu.matmul %49, %34, %cst_23 {dimension_numbers = #tpu.dot_dimension_numbers<[1], [0], [0], [1], [0, 0, 1, 1], [], []>} : vector<8x8xf32>, vector<8x16xf32>, vector<8x16xf32> -> vector<8x16xf32>
    %c0_24 = arith.constant 0 : index
    %c0_25 = arith.constant 0 : index
    %51 = vector.load %arg22[%c0_24, %c0_25] : memref<16x32xf32, #tpu.memory_space<vmem>>, vector<8x16xf32>
    tpu.vector_store %arg22[%c0_24, %c0_25], %50 {strides = array<i32>} : memref<16x32xf32, #tpu.memory_space<vmem>>, vector<8x16xf32>,
    %52 = vector.extract_strided_slice %29 {offsets = [0, 16], sizes = [8, 16], strides = [1, 1]} : vector<16x96xf32> to vector<8x16xf32>
    %53 = vector.extract_strided_slice %29 {offsets = [0, 48], sizes = [8, 16], strides = [1, 1]} : vector<16x96xf32> to vector<8x16xf32>
    %54 = vector.extract_strided_slice %29 {offsets = [0, 80], sizes = [8, 16], strides = [1, 1]} : vector<16x96xf32> to vector<8x16xf32>
    %cst_26 = arith.constant dense<0.000000e+00> : vector<8x8xf32>
    %55 = tpu.matmul %52, %53, %cst_26 {dimension_numbers = #tpu.dot_dimension_numbers<[1], [1], [0], [0], [0, 0, 1, 0], [], []>} : vector<8x16xf32>, vector<8x16xf32>, vector<8x8xf32> -> vector<8x8xf32>
    %cst_27 = arith.constant 2.500000e-01 : f32
    %56 = vector.broadcast %cst_27 : f32 to vector<8x8xf32>
    %57 = arith.mulf %55, %56 : vector<8x8xf32>
    %58 = vector.broadcast %31 : vector<1x8xf32> to vector<8x8xf32>
    %59 = arith.addf %57, %58 : vector<8x8xf32>
    %cst_28 = arith.constant dense<0xFF800000> : vector<8xf32>
    %60 = vector.multi_reduction <maximumf>, %59, %cst_28 [1] : vector<8x8xf32> to vector<8xf32>
    %61 = vector.shape_cast %60 : vector<8xf32> to vector<8x1xf32>
    %62 = vector.broadcast %61 : vector<8x1xf32> to vector<8x8xf32>
    %63 = arith.subf %59, %62 : vector<8x8xf32>
    %64 = math.exp %63 : vector<8x8xf32>
    %cst_29 = arith.constant dense<0.000000e+00> : vector<8xf32>
    %65 = vector.multi_reduction <add>, %64, %cst_29 [1] : vector<8x8xf32> to vector<8xf32>
    %66 = vector.shape_cast %65 : vector<8xf32> to vector<8x1xf32>
    %67 = tpu.reciprocal %66 {approx = true} : vector<8x1xf32> -> vector<8x1xf32>
    %68 = vector.broadcast %67 : vector<8x1xf32> to vector<8x8xf32>
    %69 = arith.mulf %64, %68 : vector<8x8xf32>
    %cst_30 = arith.constant dense<0.000000e+00> : vector<8x16xf32>
    %70 = tpu.matmul %69, %54, %cst_30 {dimension_numbers = #tpu.dot_dimension_numbers<[1], [0], [0], [1], [0, 0, 1, 1], [], []>} : vector<8x8xf32>, vector<8x16xf32>, vector<8x16xf32> -> vector<8x16xf32>
    %c0_31 = arith.constant 0 : index
    %c16 = arith.constant 16 : index
    %71 = vector.load %arg22[%c0_31, %c16] : memref<16x32xf32, #tpu.memory_space<vmem>>, vector<8x16xf32>
    tpu.vector_store %arg22[%c0_31, %c16], %70 {strides = array<i32>} : memref<16x32xf32, #tpu.memory_space<vmem>>, vector<8x16xf32>,
    %c1 = arith.constant 1 : index
    %c0_32 = arith.constant 0 : index
    %c0_33 = arith.constant 0 : index
    %72 = vector.load %arg1[%c1, %c0_32, %c0_33] : memref<2x1x8xf32, #tpu.memory_space<vmem>>, vector<1x1x8xf32>
    %73 = vector.shape_cast %72 : vector<1x1x8xf32> to vector<1x8xf32>
    %74 = vector.extract_strided_slice %29 {offsets = [8, 0], sizes = [8, 16], strides = [1, 1]} : vector<16x96xf32> to vector<8x16xf32>
    %75 = vector.extract_strided_slice %29 {offsets = [8, 32], sizes = [8, 16], strides = [1, 1]} : vector<16x96xf32> to vector<8x16xf32>
    %76 = vector.extract_strided_slice %29 {offsets = [8, 64], sizes = [8, 16], strides = [1, 1]} : vector<16x96xf32> to vector<8x16xf32>
    %cst_34 = arith.constant dense<0.000000e+00> : vector<8x8xf32>
    %77 = tpu.matmul %74, %75, %cst_34 {dimension_numbers = #tpu.dot_dimension_numbers<[1], [1], [0], [0], [0, 0, 1, 0], [], []>} : vector<8x16xf32>, vector<8x16xf32>, vector<8x8xf32> -> vector<8x8xf32>
    %cst_35 = arith.constant 2.500000e-01 : f32
    %78 = vector.broadcast %cst_35 : f32 to vector<8x8xf32>
    %79 = arith.mulf %77, %78 : vector<8x8xf32>
    %80 = vector.broadcast %73 : vector<1x8xf32> to vector<8x8xf32>
    %81 = arith.addf %79, %80 : vector<8x8xf32>
    %cst_36 = arith.constant dense<0xFF800000> : vector<8xf32>
    %82 = vector.multi_reduction <maximumf>, %81, %cst_36 [1] : vector<8x8xf32> to vector<8xf32>
    %83 = vector.shape_cast %82 : vector<8xf32> to vector<8x1xf32>
    %84 = vector.broadcast %83 : vector<8x1xf32> to vector<8x8xf32>
    %85 = arith.subf %81, %84 : vector<8x8xf32>
    %86 = math.exp %85 : vector<8x8xf32>
    %cst_37 = arith.constant dense<0.000000e+00> : vector<8xf32>
    %87 = vector.multi_reduction <add>, %86, %cst_37 [1] : vector<8x8xf32> to vector<8xf32>
    %88 = vector.shape_cast %87 : vector<8xf32> to vector<8x1xf32>
    %89 = tpu.reciprocal %88 {approx = true} : vector<8x1xf32> -> vector<8x1xf32>
    %90 = vector.broadcast %89 : vector<8x1xf32> to vector<8x8xf32>
    %91 = arith.mulf %86, %90 : vector<8x8xf32>
    %cst_38 = arith.constant dense<0.000000e+00> : vector<8x16xf32>
    %92 = tpu.matmul %91, %76, %cst_38 {dimension_numbers = #tpu.dot_dimension_numbers<[1], [0], [0], [1], [0, 0, 1, 1], [], []>} : vector<8x8xf32>, vector<8x16xf32>, vector<8x16xf32> -> vector<8x16xf32>
    %c8 = arith.constant 8 : index
    %c0_39 = arith.constant 0 : index
    %93 = vector.load %arg22[%c8, %c0_39] : memref<16x32xf32, #tpu.memory_space<vmem>>, vector<8x16xf32>
    tpu.vector_store %arg22[%c8, %c0_39], %92 {strides = array<i32>} : memref<16x32xf32, #tpu.memory_space<vmem>>, vector<8x16xf32>,
    %94 = vector.extract_strided_slice %29 {offsets = [8, 16], sizes = [8, 16], strides = [1, 1]} : vector<16x96xf32> to vector<8x16xf32>
    %95 = vector.extract_strided_slice %29 {offsets = [8, 48], sizes = [8, 16], strides = [1, 1]} : vector<16x96xf32> to vector<8x16xf32>
    %96 = vector.extract_strided_slice %29 {offsets = [8, 80], sizes = [8, 16], strides = [1, 1]} : vector<16x96xf32> to vector<8x16xf32>
    %cst_40 = arith.constant dense<0.000000e+00> : vector<8x8xf32>
    %97 = tpu.matmul %94, %95, %cst_40 {dimension_numbers = #tpu.dot_dimension_numbers<[1], [1], [0], [0], [0, 0, 1, 0], [], []>} : vector<8x16xf32>, vector<8x16xf32>, vector<8x8xf32> -> vector<8x8xf32>
    %cst_41 = arith.constant 2.500000e-01 : f32
    %98 = vector.broadcast %cst_41 : f32 to vector<8x8xf32>
    %99 = arith.mulf %97, %98 : vector<8x8xf32>
    %100 = vector.broadcast %73 : vector<1x8xf32> to vector<8x8xf32>
    %101 = arith.addf %99, %100 : vector<8x8xf32>
    %cst_42 = arith.constant dense<0xFF800000> : vector<8xf32>
    %102 = vector.multi_reduction <maximumf>, %101, %cst_42 [1] : vector<8x8xf32> to vector<8xf32>
    %103 = vector.shape_cast %102 : vector<8xf32> to vector<8x1xf32>
    %104 = vector.broadcast %103 : vector<8x1xf32> to vector<8x8xf32>
    %105 = arith.subf %101, %104 : vector<8x8xf32>
    %106 = math.exp %105 : vector<8x8xf32>
    %cst_43 = arith.constant dense<0.000000e+00> : vector<8xf32>
    %107 = vector.multi_reduction <add>, %106, %cst_43 [1] : vector<8x8xf32> to vector<8xf32>
    %108 = vector.shape_cast %107 : vector<8xf32> to vector<8x1xf32>
    %109 = tpu.reciprocal %108 {approx = true} : vector<8x1xf32> -> vector<8x1xf32>
    %110 = vector.broadcast %109 : vector<8x1xf32> to vector<8x8xf32>
    %111 = arith.mulf %106, %110 : vector<8x8xf32>
    %cst_44 = arith.constant dense<0.000000e+00> : vector<8x16xf32>
    %112 = tpu.matmul %111, %96, %cst_44 {dimension_numbers = #tpu.dot_dimension_numbers<[1], [0], [0], [1], [0, 0, 1, 1], [], []>} : vector<8x8xf32>, vector<8x16xf32>, vector<8x16xf32> -> vector<8x16xf32>
    %c8_45 = arith.constant 8 : index
    %c16_46 = arith.constant 16 : index
    %113 = vector.load %arg22[%c8_45, %c16_46] : memref<16x32xf32, #tpu.memory_space<vmem>>, vector<8x16xf32>
    tpu.vector_store %arg22[%c8_45, %c16_46], %112 {strides = array<i32>} : memref<16x32xf32, #tpu.memory_space<vmem>>, vector<8x16xf32>,
    %c0_47 = arith.constant 0 : index
    %c0_48 = arith.constant 0 : index
    %114 = vector.load %arg22[%c0_47, %c0_48] : memref<16x32xf32, #tpu.memory_space<vmem>>, vector<16x32xf32>
    %c0_49 = arith.constant 0 : index
    %c0_50 = arith.constant 0 : index
    %c0_51 = arith.constant 0 : index
    %115 = vector.load %arg6[%c0_49, %c0_50, %c0_51] : memref<2x32x32xf32, #tpu.memory_space<vmem>>, vector<1x32x32xf32>
    %116 = vector.shape_cast %115 : vector<1x32x32xf32> to vector<32x32xf32>
    %cst_52 = arith.constant dense<0.000000e+00> : vector<16x32xf32>
    %117 = tpu.matmul %114, %116, %cst_52 {dimension_numbers = #tpu.dot_dimension_numbers<[1], [0], [0], [1], [0, 0, 1, 1], [], []>} : vector<16x32xf32>, vector<32x32xf32>, vector<16x32xf32> -> vector<16x32xf32>
    %c0_53 = arith.constant 0 : index
    %c0_54 = arith.constant 0 : index
    %c0_55 = arith.constant 0 : index
    %118 = vector.load %arg7[%c0_53, %c0_54, %c0_55] : memref<2x1x32xf32, #tpu.memory_space<vmem>>, vector<1x1x32xf32>
    %119 = vector.shape_cast %118 : vector<1x1x32xf32> to vector<1x32xf32>
    %120 = vector.broadcast %119 : vector<1x32xf32> to vector<16x32xf32>
    %121 = arith.addf %117, %120 : vector<16x32xf32>
    %122 = arith.addf %121, %22 : vector<16x32xf32>
    %c0_56 = arith.constant 0 : index
    %c0_57 = arith.constant 0 : index
    %c0_58 = arith.constant 0 : index
    %123 = vector.load %arg8[%c0_56, %c0_57, %c0_58] : memref<2x1x32xf32, #tpu.memory_space<vmem>>, vector<1x1x32xf32>
    %124 = vector.shape_cast %123 : vector<1x1x32xf32> to vector<1x32xf32>
    %c0_59 = arith.constant 0 : index
    %c0_60 = arith.constant 0 : index
    %c0_61 = arith.constant 0 : index
    %125 = vector.load %arg9[%c0_59, %c0_60, %c0_61] : memref<2x1x32xf32, #tpu.memory_space<vmem>>, vector<1x1x32xf32>
    %126 = vector.shape_cast %125 : vector<1x1x32xf32> to vector<1x32xf32>
    %cst_62 = arith.constant dense<0.000000e+00> : vector<16xf32>
    %127 = vector.multi_reduction <add>, %122, %cst_62 [1] : vector<16x32xf32> to vector<16xf32>
    %128 = vector.shape_cast %127 : vector<16xf32> to vector<16x1xf32>
    %cst_63 = arith.constant 3.200000e+01 : f32
    %129 = vector.broadcast %cst_63 : f32 to vector<16x1xf32>
    %130 = arith.divf %128, %129 : vector<16x1xf32>
    %131 = vector.broadcast %130 : vector<16x1xf32> to vector<16x32xf32>
    %132 = arith.subf %122, %131 : vector<16x32xf32>
    %133 = arith.mulf %132, %132 : vector<16x32xf32>
    %cst_64 = arith.constant dense<0.000000e+00> : vector<16xf32>
    %134 = vector.multi_reduction <add>, %133, %cst_64 [1] : vector<16x32xf32> to vector<16xf32>
    %135 = vector.shape_cast %134 : vector<16xf32> to vector<16x1xf32>
    %cst_65 = arith.constant 3.200000e+01 : f32
    %136 = vector.broadcast %cst_65 : f32 to vector<16x1xf32>
    %137 = arith.divf %135, %136 : vector<16x1xf32>
    %cst_66 = arith.constant 9.99999996E-13 : f32
    %138 = vector.broadcast %cst_66 : f32 to vector<16x1xf32>
    %139 = arith.addf %137, %138 : vector<16x1xf32>
    %140 = math.rsqrt %139 : vector<16x1xf32>
    %141 = vector.broadcast %140 : vector<16x1xf32> to vector<16x32xf32>
    %142 = arith.mulf %132, %141 : vector<16x32xf32>
    %143 = vector.broadcast %124 : vector<1x32xf32> to vector<16x32xf32>
    %144 = arith.mulf %142, %143 : vector<16x32xf32>
    %145 = vector.broadcast %126 : vector<1x32xf32> to vector<16x32xf32>
    %146 = arith.addf %144, %145 : vector<16x32xf32>
    %c0_67 = arith.constant 0 : index
    %c0_68 = arith.constant 0 : index
    %c0_69 = arith.constant 0 : index
    %147 = vector.load %arg10[%c0_67, %c0_68, %c0_69] : memref<2x32x64xf32, #tpu.memory_space<vmem>>, vector<1x32x64xf32>
    %148 = vector.shape_cast %147 : vector<1x32x64xf32> to vector<32x64xf32>
    %cst_70 = arith.constant dense<0.000000e+00> : vector<16x64xf32>
    %149 = tpu.matmul %146, %148, %cst_70 {dimension_numbers = #tpu.dot_dimension_numbers<[1], [0], [0], [1], [0, 0, 1, 1], [], []>} : vector<16x32xf32>, vector<32x64xf32>, vector<16x64xf32> -> vector<16x64xf32>
    %c0_71 = arith.constant 0 : index
    %c0_72 = arith.constant 0 : index
    %c0_73 = arith.constant 0 : index
    %150 = vector.load %arg11[%c0_71, %c0_72, %c0_73] : memref<2x1x64xf32, #tpu.memory_space<vmem>>, vector<1x1x64xf32>
    %151 = vector.shape_cast %150 : vector<1x1x64xf32> to vector<1x64xf32>
    %152 = vector.broadcast %151 : vector<1x64xf32> to vector<16x64xf32>
    %153 = arith.addf %149, %152 : vector<16x64xf32>
    %cst_74 = arith.constant 5.000000e-01 : f32
    %154 = vector.broadcast %cst_74 : f32 to vector<16x64xf32>
    %155 = arith.mulf %154, %153 : vector<16x64xf32>
    %cst_75 = arith.constant 4.471500e-02 : f32
    %156 = vector.broadcast %cst_75 : f32 to vector<16x64xf32>
    %157 = arith.mulf %156, %153 : vector<16x64xf32>
    %158 = arith.mulf %157, %153 : vector<16x64xf32>
    %159 = arith.mulf %158, %153 : vector<16x64xf32>
    %160 = arith.addf %153, %159 : vector<16x64xf32>
    %cst_76 = arith.constant 0.797884583 : f32
    %161 = vector.broadcast %cst_76 : f32 to vector<16x64xf32>
    %162 = arith.mulf %161, %160 : vector<16x64xf32>
    %163 = math.tanh %162 : vector<16x64xf32>
    %cst_77 = arith.constant 1.000000e+00 : f32
    %164 = vector.broadcast %cst_77 : f32 to vector<16x64xf32>
    %165 = arith.addf %164, %163 : vector<16x64xf32>
    %166 = arith.mulf %155, %165 : vector<16x64xf32>
    %c0_78 = arith.constant 0 : index
    %c0_79 = arith.constant 0 : index
    %c0_80 = arith.constant 0 : index
    %167 = vector.load %arg12[%c0_78, %c0_79, %c0_80] : memref<2x64x32xf32, #tpu.memory_space<vmem>>, vector<1x64x32xf32>
    %168 = vector.shape_cast %167 : vector<1x64x32xf32> to vector<64x32xf32>
    %cst_81 = arith.constant dense<0.000000e+00> : vector<16x32xf32>
    %169 = tpu.matmul %166, %168, %cst_81 {dimension_numbers = #tpu.dot_dimension_numbers<[1], [0], [0], [1], [0, 0, 1, 1], [], []>} : vector<16x64xf32>, vector<64x32xf32>, vector<16x32xf32> -> vector<16x32xf32>
    %c0_82 = arith.constant 0 : index
    %c0_83 = arith.constant 0 : index
    %c0_84 = arith.constant 0 : index
    %170 = vector.load %arg13[%c0_82, %c0_83, %c0_84] : memref<2x1x32xf32, #tpu.memory_space<vmem>>, vector<1x1x32xf32>
    %171 = vector.shape_cast %170 : vector<1x1x32xf32> to vector<1x32xf32>
    %172 = vector.broadcast %171 : vector<1x32xf32> to vector<16x32xf32>
    %173 = arith.addf %169, %172 : vector<16x32xf32>
    %174 = arith.addf %173, %146 : vector<16x32xf32>
    %c0_85 = arith.constant 0 : index
    %c0_86 = arith.constant 0 : index
    %c0_87 = arith.constant 0 : index
    %175 = vector.load %arg14[%c0_85, %c0_86, %c0_87] : memref<2x1x32xf32, #tpu.memory_space<vmem>>, vector<1x1x32xf32>
    %176 = vector.shape_cast %175 : vector<1x1x32xf32> to vector<1x32xf32>
    %c0_88 = arith.constant 0 : index
    %c0_89 = arith.constant 0 : index
    %c0_90 = arith.constant 0 : index
    %177 = vector.load %arg15[%c0_88, %c0_89, %c0_90] : memref<2x1x32xf32, #tpu.memory_space<vmem>>, vector<1x1x32xf32>
    %178 = vector.shape_cast %177 : vector<1x1x32xf32> to vector<1x32xf32>
    %cst_91 = arith.constant dense<0.000000e+00> : vector<16xf32>
    %179 = vector.multi_reduction <add>, %174, %cst_91 [1] : vector<16x32xf32> to vector<16xf32>
    %180 = vector.shape_cast %179 : vector<16xf32> to vector<16x1xf32>
    %cst_92 = arith.constant 3.200000e+01 : f32
    %181 = vector.broadcast %cst_92 : f32 to vector<16x1xf32>
    %182 = arith.divf %180, %181 : vector<16x1xf32>
    %183 = vector.broadcast %182 : vector<16x1xf32> to vector<16x32xf32>
    %184 = arith.subf %174, %183 : vector<16x32xf32>
    %185 = arith.mulf %184, %184 : vector<16x32xf32>
    %cst_93 = arith.constant dense<0.000000e+00> : vector<16xf32>
    %186 = vector.multi_reduction <add>, %185, %cst_93 [1] : vector<16x32xf32> to vector<16xf32>
    %187 = vector.shape_cast %186 : vector<16xf32> to vector<16x1xf32>
    %cst_94 = arith.constant 3.200000e+01 : f32
    %188 = vector.broadcast %cst_94 : f32 to vector<16x1xf32>
    %189 = arith.divf %187, %188 : vector<16x1xf32>
    %cst_95 = arith.constant 9.99999996E-13 : f32
    %190 = vector.broadcast %cst_95 : f32 to vector<16x1xf32>
    %191 = arith.addf %189, %190 : vector<16x1xf32>
    %192 = math.rsqrt %191 : vector<16x1xf32>
    %193 = vector.broadcast %192 : vector<16x1xf32> to vector<16x32xf32>
    %194 = arith.mulf %184, %193 : vector<16x32xf32>
    %195 = vector.broadcast %176 : vector<1x32xf32> to vector<16x32xf32>
    %196 = arith.mulf %194, %195 : vector<16x32xf32>
    %197 = vector.broadcast %178 : vector<1x32xf32> to vector<16x32xf32>
    %198 = arith.addf %196, %197 : vector<16x32xf32>
    %c1_96 = arith.constant 1 : index
    %c0_97 = arith.constant 0 : index
    %c0_98 = arith.constant 0 : index
    %199 = vector.load %arg4[%c1_96, %c0_97, %c0_98] : memref<2x32x96xf32, #tpu.memory_space<vmem>>, vector<1x32x96xf32>
    %200 = vector.shape_cast %199 : vector<1x32x96xf32> to vector<32x96xf32>
    %cst_99 = arith.constant dense<0.000000e+00> : vector<16x96xf32>
    %201 = tpu.matmul %198, %200, %cst_99 {dimension_numbers = #tpu.dot_dimension_numbers<[1], [0], [0], [1], [0, 0, 1, 1], [], []>} : vector<16x32xf32>, vector<32x96xf32>, vector<16x96xf32> -> vector<16x96xf32>
    %c1_100 = arith.constant 1 : index
    %c0_101 = arith.constant 0 : index
    %c0_102 = arith.constant 0 : index
    %202 = vector.load %arg5[%c1_100, %c0_101, %c0_102] : memref<2x1x96xf32, #tpu.memory_space<vmem>>, vector<1x1x96xf32>
    %203 = vector.shape_cast %202 : vector<1x1x96xf32> to vector<1x96xf32>
    %204 = vector.broadcast %203 : vector<1x96xf32> to vector<16x96xf32>
    %205 = arith.addf %201, %204 : vector<16x96xf32>
    %c0_103 = arith.constant 0 : index
    %c0_104 = arith.constant 0 : index
    %c0_105 = arith.constant 0 : index
    %206 = vector.load %arg1[%c0_103, %c0_104, %c0_105] : memref<2x1x8xf32, #tpu.memory_space<vmem>>, vector<1x1x8xf32>
    %207 = vector.shape_cast %206 : vector<1x1x8xf32> to vector<1x8xf32>
    %208 = vector.extract_strided_slice %205 {offsets = [0, 0], sizes = [8, 16], strides = [1, 1]} : vector<16x96xf32> to vector<8x16xf32>
    %209 = vector.extract_strided_slice %205 {offsets = [0, 32], sizes = [8, 16], strides = [1, 1]} : vector<16x96xf32> to vector<8x16xf32>
    %210 = vector.extract_strided_slice %205 {offsets = [0, 64], sizes = [8, 16], strides = [1, 1]} : vector<16x96xf32> to vector<8x16xf32>
    %cst_106 = arith.constant dense<0.000000e+00> : vector<8x8xf32>
    %211 = tpu.matmul %208, %209, %cst_106 {dimension_numbers = #tpu.dot_dimension_numbers<[1], [1], [0], [0], [0, 0, 1, 0], [], []>} : vector<8x16xf32>, vector<8x16xf32>, vector<8x8xf32> -> vector<8x8xf32>
    %cst_107 = arith.constant 2.500000e-01 : f32
    %212 = vector.broadcast %cst_107 : f32 to vector<8x8xf32>
    %213 = arith.mulf %211, %212 : vector<8x8xf32>
    %214 = vector.broadcast %207 : vector<1x8xf32> to vector<8x8xf32>
    %215 = arith.addf %213, %214 : vector<8x8xf32>
    %cst_108 = arith.constant dense<0xFF800000> : vector<8xf32>
    %216 = vector.multi_reduction <maximumf>, %215, %cst_108 [1] : vector<8x8xf32> to vector<8xf32>
    %217 = vector.shape_cast %216 : vector<8xf32> to vector<8x1xf32>
    %218 = vector.broadcast %217 : vector<8x1xf32> to vector<8x8xf32>
    %219 = arith.subf %215, %218 : vector<8x8xf32>
    %220 = math.exp %219 : vector<8x8xf32>
    %cst_109 = arith.constant dense<0.000000e+00> : vector<8xf32>
    %221 = vector.multi_reduction <add>, %220, %cst_109 [1] : vector<8x8xf32> to vector<8xf32>
    %222 = vector.shape_cast %221 : vector<8xf32> to vector<8x1xf32>
    %223 = tpu.reciprocal %222 {approx = true} : vector<8x1xf32> -> vector<8x1xf32>
    %224 = vector.broadcast %223 : vector<8x1xf32> to vector<8x8xf32>
    %225 = arith.mulf %220, %224 : vector<8x8xf32>
    %cst_110 = arith.constant dense<0.000000e+00> : vector<8x16xf32>
    %226 = tpu.matmul %225, %210, %cst_110 {dimension_numbers = #tpu.dot_dimension_numbers<[1], [0], [0], [1], [0, 0, 1, 1], [], []>} : vector<8x8xf32>, vector<8x16xf32>, vector<8x16xf32> -> vector<8x16xf32>
    %c0_111 = arith.constant 0 : index
    %c0_112 = arith.constant 0 : index
    %227 = vector.load %arg22[%c0_111, %c0_112] : memref<16x32xf32, #tpu.memory_space<vmem>>, vector<8x16xf32>
    tpu.vector_store %arg22[%c0_111, %c0_112], %226 {strides = array<i32>} : memref<16x32xf32, #tpu.memory_space<vmem>>, vector<8x16xf32>,
    %228 = vector.extract_strided_slice %205 {offsets = [0, 16], sizes = [8, 16], strides = [1, 1]} : vector<16x96xf32> to vector<8x16xf32>
    %229 = vector.extract_strided_slice %205 {offsets = [0, 48], sizes = [8, 16], strides = [1, 1]} : vector<16x96xf32> to vector<8x16xf32>
    %230 = vector.extract_strided_slice %205 {offsets = [0, 80], sizes = [8, 16], strides = [1, 1]} : vector<16x96xf32> to vector<8x16xf32>
    %cst_113 = arith.constant dense<0.000000e+00> : vector<8x8xf32>
    %231 = tpu.matmul %228, %229, %cst_113 {dimension_numbers = #tpu.dot_dimension_numbers<[1], [1], [0], [0], [0, 0, 1, 0], [], []>} : vector<8x16xf32>, vector<8x16xf32>, vector<8x8xf32> -> vector<8x8xf32>
    %cst_114 = arith.constant 2.500000e-01 : f32
    %232 = vector.broadcast %cst_114 : f32 to vector<8x8xf32>
    %233 = arith.mulf %231, %232 : vector<8x8xf32>
    %234 = vector.broadcast %207 : vector<1x8xf32> to vector<8x8xf32>
    %235 = arith.addf %233, %234 : vector<8x8xf32>
    %cst_115 = arith.constant dense<0xFF800000> : vector<8xf32>
    %236 = vector.multi_reduction <maximumf>, %235, %cst_115 [1] : vector<8x8xf32> to vector<8xf32>
    %237 = vector.shape_cast %236 : vector<8xf32> to vector<8x1xf32>
    %238 = vector.broadcast %237 : vector<8x1xf32> to vector<8x8xf32>
    %239 = arith.subf %235, %238 : vector<8x8xf32>
    %240 = math.exp %239 : vector<8x8xf32>
    %cst_116 = arith.constant dense<0.000000e+00> : vector<8xf32>
    %241 = vector.multi_reduction <add>, %240, %cst_116 [1] : vector<8x8xf32> to vector<8xf32>
    %242 = vector.shape_cast %241 : vector<8xf32> to vector<8x1xf32>
    %243 = tpu.reciprocal %242 {approx = true} : vector<8x1xf32> -> vector<8x1xf32>
    %244 = vector.broadcast %243 : vector<8x1xf32> to vector<8x8xf32>
    %245 = arith.mulf %240, %244 : vector<8x8xf32>
    %cst_117 = arith.constant dense<0.000000e+00> : vector<8x16xf32>
    %246 = tpu.matmul %245, %230, %cst_117 {dimension_numbers = #tpu.dot_dimension_numbers<[1], [0], [0], [1], [0, 0, 1, 1], [], []>} : vector<8x8xf32>, vector<8x16xf32>, vector<8x16xf32> -> vector<8x16xf32>
    %c0_118 = arith.constant 0 : index
    %c16_119 = arith.constant 16 : index
    %247 = vector.load %arg22[%c0_118, %c16_119] : memref<16x32xf32, #tpu.memory_space<vmem>>, vector<8x16xf32>
    tpu.vector_store %arg22[%c0_118, %c16_119], %246 {strides = array<i32>} : memref<16x32xf32, #tpu.memory_space<vmem>>, vector<8x16xf32>,
    %c1_120 = arith.constant 1 : index
    %c0_121 = arith.constant 0 : index
    %c0_122 = arith.constant 0 : index
    %248 = vector.load %arg1[%c1_120, %c0_121, %c0_122] : memref<2x1x8xf32, #tpu.memory_space<vmem>>, vector<1x1x8xf32>
    %249 = vector.shape_cast %248 : vector<1x1x8xf32> to vector<1x8xf32>
    %250 = vector.extract_strided_slice %205 {offsets = [8, 0], sizes = [8, 16], strides = [1, 1]} : vector<16x96xf32> to vector<8x16xf32>
    %251 = vector.extract_strided_slice %205 {offsets = [8, 32], sizes = [8, 16], strides = [1, 1]} : vector<16x96xf32> to vector<8x16xf32>
    %252 = vector.extract_strided_slice %205 {offsets = [8, 64], sizes = [8, 16], strides = [1, 1]} : vector<16x96xf32> to vector<8x16xf32>
    %cst_123 = arith.constant dense<0.000000e+00> : vector<8x8xf32>
    %253 = tpu.matmul %250, %251, %cst_123 {dimension_numbers = #tpu.dot_dimension_numbers<[1], [1], [0], [0], [0, 0, 1, 0], [], []>} : vector<8x16xf32>, vector<8x16xf32>, vector<8x8xf32> -> vector<8x8xf32>
    %cst_124 = arith.constant 2.500000e-01 : f32
    %254 = vector.broadcast %cst_124 : f32 to vector<8x8xf32>
    %255 = arith.mulf %253, %254 : vector<8x8xf32>
    %256 = vector.broadcast %249 : vector<1x8xf32> to vector<8x8xf32>
    %257 = arith.addf %255, %256 : vector<8x8xf32>
    %cst_125 = arith.constant dense<0xFF800000> : vector<8xf32>
    %258 = vector.multi_reduction <maximumf>, %257, %cst_125 [1] : vector<8x8xf32> to vector<8xf32>
    %259 = vector.shape_cast %258 : vector<8xf32> to vector<8x1xf32>
    %260 = vector.broadcast %259 : vector<8x1xf32> to vector<8x8xf32>
    %261 = arith.subf %257, %260 : vector<8x8xf32>
    %262 = math.exp %261 : vector<8x8xf32>
    %cst_126 = arith.constant dense<0.000000e+00> : vector<8xf32>
    %263 = vector.multi_reduction <add>, %262, %cst_126 [1] : vector<8x8xf32> to vector<8xf32>
    %264 = vector.shape_cast %263 : vector<8xf32> to vector<8x1xf32>
    %265 = tpu.reciprocal %264 {approx = true} : vector<8x1xf32> -> vector<8x1xf32>
    %266 = vector.broadcast %265 : vector<8x1xf32> to vector<8x8xf32>
    %267 = arith.mulf %262, %266 : vector<8x8xf32>
    %cst_127 = arith.constant dense<0.000000e+00> : vector<8x16xf32>
    %268 = tpu.matmul %267, %252, %cst_127 {dimension_numbers = #tpu.dot_dimension_numbers<[1], [0], [0], [1], [0, 0, 1, 1], [], []>} : vector<8x8xf32>, vector<8x16xf32>, vector<8x16xf32> -> vector<8x16xf32>
    %c8_128 = arith.constant 8 : index
    %c0_129 = arith.constant 0 : index
    %269 = vector.load %arg22[%c8_128, %c0_129] : memref<16x32xf32, #tpu.memory_space<vmem>>, vector<8x16xf32>
    tpu.vector_store %arg22[%c8_128, %c0_129], %268 {strides = array<i32>} : memref<16x32xf32, #tpu.memory_space<vmem>>, vector<8x16xf32>,
    %270 = vector.extract_strided_slice %205 {offsets = [8, 16], sizes = [8, 16], strides = [1, 1]} : vector<16x96xf32> to vector<8x16xf32>
    %271 = vector.extract_strided_slice %205 {offsets = [8, 48], sizes = [8, 16], strides = [1, 1]} : vector<16x96xf32> to vector<8x16xf32>
    %272 = vector.extract_strided_slice %205 {offsets = [8, 80], sizes = [8, 16], strides = [1, 1]} : vector<16x96xf32> to vector<8x16xf32>
    %cst_130 = arith.constant dense<0.000000e+00> : vector<8x8xf32>
    %273 = tpu.matmul %270, %271, %cst_130 {dimension_numbers = #tpu.dot_dimension_numbers<[1], [1], [0], [0], [0, 0, 1, 0], [], []>} : vector<8x16xf32>, vector<8x16xf32>, vector<8x8xf32> -> vector<8x8xf32>
    %cst_131 = arith.constant 2.500000e-01 : f32
    %274 = vector.broadcast %cst_131 : f32 to vector<8x8xf32>
    %275 = arith.mulf %273, %274 : vector<8x8xf32>
    %276 = vector.broadcast %249 : vector<1x8xf32> to vector<8x8xf32>
    %277 = arith.addf %275, %276 : vector<8x8xf32>
    %cst_132 = arith.constant dense<0xFF800000> : vector<8xf32>
    %278 = vector.multi_reduction <maximumf>, %277, %cst_132 [1] : vector<8x8xf32> to vector<8xf32>
    %279 = vector.shape_cast %278 : vector<8xf32> to vector<8x1xf32>
    %280 = vector.broadcast %279 : vector<8x1xf32> to vector<8x8xf32>
    %281 = arith.subf %277, %280 : vector<8x8xf32>
    %282 = math.exp %281 : vector<8x8xf32>
    %cst_133 = arith.constant dense<0.000000e+00> : vector<8xf32>
    %283 = vector.multi_reduction <add>, %282, %cst_133 [1] : vector<8x8xf32> to vector<8xf32>
    %284 = vector.shape_cast %283 : vector<8xf32> to vector<8x1xf32>
    %285 = tpu.reciprocal %284 {approx = true} : vector<8x1xf32> -> vector<8x1xf32>
    %286 = vector.broadcast %285 : vector<8x1xf32> to vector<8x8xf32>
    %287 = arith.mulf %282, %286 : vector<8x8xf32>
    %cst_134 = arith.constant dense<0.000000e+00> : vector<8x16xf32>
    %288 = tpu.matmul %287, %272, %cst_134 {dimension_numbers = #tpu.dot_dimension_numbers<[1], [0], [0], [1], [0, 0, 1, 1], [], []>} : vector<8x8xf32>, vector<8x16xf32>, vector<8x16xf32> -> vector<8x16xf32>
    %c8_135 = arith.constant 8 : index
    %c16_136 = arith.constant 16 : index
    %289 = vector.load %arg22[%c8_135, %c16_136] : memref<16x32xf32, #tpu.memory_space<vmem>>, vector<8x16xf32>
    tpu.vector_store %arg22[%c8_135, %c16_136], %288 {strides = array<i32>} : memref<16x32xf32, #tpu.memory_space<vmem>>, vector<8x16xf32>,
    %c0_137 = arith.constant 0 : index
    %c0_138 = arith.constant 0 : index
    %290 = vector.load %arg22[%c0_137, %c0_138] : memref<16x32xf32, #tpu.memory_space<vmem>>, vector<16x32xf32>
    %c1_139 = arith.constant 1 : index
    %c0_140 = arith.constant 0 : index
    %c0_141 = arith.constant 0 : index
    %291 = vector.load %arg6[%c1_139, %c0_140, %c0_141] : memref<2x32x32xf32, #tpu.memory_space<vmem>>, vector<1x32x32xf32>
    %292 = vector.shape_cast %291 : vector<1x32x32xf32> to vector<32x32xf32>
    %cst_142 = arith.constant dense<0.000000e+00> : vector<16x32xf32>
    %293 = tpu.matmul %290, %292, %cst_142 {dimension_numbers = #tpu.dot_dimension_numbers<[1], [0], [0], [1], [0, 0, 1, 1], [], []>} : vector<16x32xf32>, vector<32x32xf32>, vector<16x32xf32> -> vector<16x32xf32>
    %c1_143 = arith.constant 1 : index
    %c0_144 = arith.constant 0 : index
    %c0_145 = arith.constant 0 : index
    %294 = vector.load %arg7[%c1_143, %c0_144, %c0_145] : memref<2x1x32xf32, #tpu.memory_space<vmem>>, vector<1x1x32xf32>
    %295 = vector.shape_cast %294 : vector<1x1x32xf32> to vector<1x32xf32>
    %296 = vector.broadcast %295 : vector<1x32xf32> to vector<16x32xf32>
    %297 = arith.addf %293, %296 : vector<16x32xf32>
    %298 = arith.addf %297, %198 : vector<16x32xf32>
    %c1_146 = arith.constant 1 : index
    %c0_147 = arith.constant 0 : index
    %c0_148 = arith.constant 0 : index
    %299 = vector.load %arg8[%c1_146, %c0_147, %c0_148] : memref<2x1x32xf32, #tpu.memory_space<vmem>>, vector<1x1x32xf32>
    %300 = vector.shape_cast %299 : vector<1x1x32xf32> to vector<1x32xf32>
    %c1_149 = arith.constant 1 : index
    %c0_150 = arith.constant 0 : index
    %c0_151 = arith.constant 0 : index
    %301 = vector.load %arg9[%c1_149, %c0_150, %c0_151] : memref<2x1x32xf32, #tpu.memory_space<vmem>>, vector<1x1x32xf32>
    %302 = vector.shape_cast %301 : vector<1x1x32xf32> to vector<1x32xf32>
    %cst_152 = arith.constant dense<0.000000e+00> : vector<16xf32>
    %303 = vector.multi_reduction <add>, %298, %cst_152 [1] : vector<16x32xf32> to vector<16xf32>
    %304 = vector.shape_cast %303 : vector<16xf32> to vector<16x1xf32>
    %cst_153 = arith.constant 3.200000e+01 : f32
    %305 = vector.broadcast %cst_153 : f32 to vector<16x1xf32>
    %306 = arith.divf %304, %305 : vector<16x1xf32>
    %307 = vector.broadcast %306 : vector<16x1xf32> to vector<16x32xf32>
    %308 = arith.subf %298, %307 : vector<16x32xf32>
    %309 = arith.mulf %308, %308 : vector<16x32xf32>
    %cst_154 = arith.constant dense<0.000000e+00> : vector<16xf32>
    %310 = vector.multi_reduction <add>, %309, %cst_154 [1] : vector<16x32xf32> to vector<16xf32>
    %311 = vector.shape_cast %310 : vector<16xf32> to vector<16x1xf32>
    %cst_155 = arith.constant 3.200000e+01 : f32
    %312 = vector.broadcast %cst_155 : f32 to vector<16x1xf32>
    %313 = arith.divf %311, %312 : vector<16x1xf32>
    %cst_156 = arith.constant 9.99999996E-13 : f32
    %314 = vector.broadcast %cst_156 : f32 to vector<16x1xf32>
    %315 = arith.addf %313, %314 : vector<16x1xf32>
    %316 = math.rsqrt %315 : vector<16x1xf32>
    %317 = vector.broadcast %316 : vector<16x1xf32> to vector<16x32xf32>
    %318 = arith.mulf %308, %317 : vector<16x32xf32>
    %319 = vector.broadcast %300 : vector<1x32xf32> to vector<16x32xf32>
    %320 = arith.mulf %318, %319 : vector<16x32xf32>
    %321 = vector.broadcast %302 : vector<1x32xf32> to vector<16x32xf32>
    %322 = arith.addf %320, %321 : vector<16x32xf32>
    %c1_157 = arith.constant 1 : index
    %c0_158 = arith.constant 0 : index
    %c0_159 = arith.constant 0 : index
    %323 = vector.load %arg10[%c1_157, %c0_158, %c0_159] : memref<2x32x64xf32, #tpu.memory_space<vmem>>, vector<1x32x64xf32>
    %324 = vector.shape_cast %323 : vector<1x32x64xf32> to vector<32x64xf32>
    %cst_160 = arith.constant dense<0.000000e+00> : vector<16x64xf32>
    %325 = tpu.matmul %322, %324, %cst_160 {dimension_numbers = #tpu.dot_dimension_numbers<[1], [0], [0], [1], [0, 0, 1, 1], [], []>} : vector<16x32xf32>, vector<32x64xf32>, vector<16x64xf32> -> vector<16x64xf32>
    %c1_161 = arith.constant 1 : index
    %c0_162 = arith.constant 0 : index
    %c0_163 = arith.constant 0 : index
    %326 = vector.load %arg11[%c1_161, %c0_162, %c0_163] : memref<2x1x64xf32, #tpu.memory_space<vmem>>, vector<1x1x64xf32>
    %327 = vector.shape_cast %326 : vector<1x1x64xf32> to vector<1x64xf32>
    %328 = vector.broadcast %327 : vector<1x64xf32> to vector<16x64xf32>
    %329 = arith.addf %325, %328 : vector<16x64xf32>
    %cst_164 = arith.constant 5.000000e-01 : f32
    %330 = vector.broadcast %cst_164 : f32 to vector<16x64xf32>
    %331 = arith.mulf %330, %329 : vector<16x64xf32>
    %cst_165 = arith.constant 4.471500e-02 : f32
    %332 = vector.broadcast %cst_165 : f32 to vector<16x64xf32>
    %333 = arith.mulf %332, %329 : vector<16x64xf32>
    %334 = arith.mulf %333, %329 : vector<16x64xf32>
    %335 = arith.mulf %334, %329 : vector<16x64xf32>
    %336 = arith.addf %329, %335 : vector<16x64xf32>
    %cst_166 = arith.constant 0.797884583 : f32
    %337 = vector.broadcast %cst_166 : f32 to vector<16x64xf32>
    %338 = arith.mulf %337, %336 : vector<16x64xf32>
    %339 = math.tanh %338 : vector<16x64xf32>
    %cst_167 = arith.constant 1.000000e+00 : f32
    %340 = vector.broadcast %cst_167 : f32 to vector<16x64xf32>
    %341 = arith.addf %340, %339 : vector<16x64xf32>
    %342 = arith.mulf %331, %341 : vector<16x64xf32>
    %c1_168 = arith.constant 1 : index
    %c0_169 = arith.constant 0 : index
    %c0_170 = arith.constant 0 : index
    %343 = vector.load %arg12[%c1_168, %c0_169, %c0_170] : memref<2x64x32xf32, #tpu.memory_space<vmem>>, vector<1x64x32xf32>
    %344 = vector.shape_cast %343 : vector<1x64x32xf32> to vector<64x32xf32>
    %cst_171 = arith.constant dense<0.000000e+00> : vector<16x32xf32>
    %345 = tpu.matmul %342, %344, %cst_171 {dimension_numbers = #tpu.dot_dimension_numbers<[1], [0], [0], [1], [0, 0, 1, 1], [], []>} : vector<16x64xf32>, vector<64x32xf32>, vector<16x32xf32> -> vector<16x32xf32>
    %c1_172 = arith.constant 1 : index
    %c0_173 = arith.constant 0 : index
    %c0_174 = arith.constant 0 : index
    %346 = vector.load %arg13[%c1_172, %c0_173, %c0_174] : memref<2x1x32xf32, #tpu.memory_space<vmem>>, vector<1x1x32xf32>
    %347 = vector.shape_cast %346 : vector<1x1x32xf32> to vector<1x32xf32>
    %348 = vector.broadcast %347 : vector<1x32xf32> to vector<16x32xf32>
    %349 = arith.addf %345, %348 : vector<16x32xf32>
    %350 = arith.addf %349, %322 : vector<16x32xf32>
    %c1_175 = arith.constant 1 : index
    %c0_176 = arith.constant 0 : index
    %c0_177 = arith.constant 0 : index
    %351 = vector.load %arg14[%c1_175, %c0_176, %c0_177] : memref<2x1x32xf32, #tpu.memory_space<vmem>>, vector<1x1x32xf32>
    %352 = vector.shape_cast %351 : vector<1x1x32xf32> to vector<1x32xf32>
    %c1_178 = arith.constant 1 : index
    %c0_179 = arith.constant 0 : index
    %c0_180 = arith.constant 0 : index
    %353 = vector.load %arg15[%c1_178, %c0_179, %c0_180] : memref<2x1x32xf32, #tpu.memory_space<vmem>>, vector<1x1x32xf32>
    %354 = vector.shape_cast %353 : vector<1x1x32xf32> to vector<1x32xf32>
    %cst_181 = arith.constant dense<0.000000e+00> : vector<16xf32>
    %355 = vector.multi_reduction <add>, %350, %cst_181 [1] : vector<16x32xf32> to vector<16xf32>
    %356 = vector.shape_cast %355 : vector<16xf32> to vector<16x1xf32>
    %cst_182 = arith.constant 3.200000e+01 : f32
    %357 = vector.broadcast %cst_182 : f32 to vector<16x1xf32>
    %358 = arith.divf %356, %357 : vector<16x1xf32>
    %359 = vector.broadcast %358 : vector<16x1xf32> to vector<16x32xf32>
    %360 = arith.subf %350, %359 : vector<16x32xf32>
    %361 = arith.mulf %360, %360 : vector<16x32xf32>
    %cst_183 = arith.constant dense<0.000000e+00> : vector<16xf32>
    %362 = vector.multi_reduction <add>, %361, %cst_183 [1] : vector<16x32xf32> to vector<16xf32>
    %363 = vector.shape_cast %362 : vector<16xf32> to vector<16x1xf32>
    %cst_184 = arith.constant 3.200000e+01 : f32
    %364 = vector.broadcast %cst_184 : f32 to vector<16x1xf32>
    %365 = arith.divf %363, %364 : vector<16x1xf32>
    %cst_185 = arith.constant 9.99999996E-13 : f32
    %366 = vector.broadcast %cst_185 : f32 to vector<16x1xf32>
    %367 = arith.addf %365, %366 : vector<16x1xf32>
    %368 = math.rsqrt %367 : vector<16x1xf32>
    %369 = vector.broadcast %368 : vector<16x1xf32> to vector<16x32xf32>
    %370 = arith.mulf %360, %369 : vector<16x32xf32>
    %371 = vector.broadcast %352 : vector<1x32xf32> to vector<16x32xf32>
    %372 = arith.mulf %370, %371 : vector<16x32xf32>
    %373 = vector.broadcast %354 : vector<1x32xf32> to vector<16x32xf32>
    %374 = arith.addf %372, %373 : vector<16x32xf32>
    %c0_186 = arith.constant 0 : index
    %c0_187 = arith.constant 0 : index
    %375 = vector.load %arg18[%c0_186, %c0_187] : memref<32x128xf32, #tpu.memory_space<vmem>>, vector<32x128xf32>
    %cst_188 = arith.constant dense<0.000000e+00> : vector<16x128xf32>
    %376 = tpu.matmul %374, %375, %cst_188 {dimension_numbers = #tpu.dot_dimension_numbers<[1], [0], [0], [1], [0, 0, 1, 1], [], []>} : vector<16x32xf32>, vector<32x128xf32>, vector<16x128xf32> -> vector<16x128xf32>
    %c0_189 = arith.constant 0 : index
    %c0_190 = arith.constant 0 : index
    %377 = vector.load %arg19[%c0_189, %c0_190] : memref<1x128xf32, #tpu.memory_space<vmem>>, vector<1x128xf32>
    %378 = vector.broadcast %377 : vector<1x128xf32> to vector<16x128xf32>
    %379 = arith.addf %376, %378 : vector<16x128xf32>
    %cst_191 = arith.constant 0.000000e+00 : f32
    %380 = vector.broadcast %cst_191 : f32 to vector<16x128xf32>
    %381 = arith.maximumf %379, %380 : vector<16x128xf32>
    %c0_192 = arith.constant 0 : index
    %c0_193 = arith.constant 0 : index
    %382 = vector.load %arg20[%c0_192, %c0_193] : memref<16x128xf32, #tpu.memory_space<vmem>>, vector<16x128xf32>
    tpu.vector_store %arg20[%c0_192, %c0_193], %381 {strides = array<i32>} : memref<16x128xf32, #tpu.memory_space<vmem>>, vector<16x128xf32>,
    %383 = vector.extract_strided_slice %374 {offsets = [0, 0], sizes = [1, 32], strides = [1, 1]} : vector<16x32xf32> to vector<1x32xf32>
    %c0_194 = arith.constant 0 : index
    %c0_195 = arith.constant 0 : index
    %384 = vector.load %arg16[%c0_194, %c0_195] : memref<32x128xf32, #tpu.memory_space<vmem>>, vector<32x128xf32>
    %cst_196 = arith.constant dense<0.000000e+00> : vector<1x128xf32>
    %385 = tpu.matmul %383, %384, %cst_196 {dimension_numbers = #tpu.dot_dimension_numbers<[1], [0], [0], [1], [0, 0, 1, 1], [], []>} : vector<1x32xf32>, vector<32x128xf32>, vector<1x128xf32> -> vector<1x128xf32>
    %c0_197 = arith.constant 0 : index
    %c0_198 = arith.constant 0 : index
    %386 = vector.load %arg17[%c0_197, %c0_198] : memref<1x128xf32, #tpu.memory_space<vmem>>, vector<1x128xf32>
    %387 = arith.addf %385, %386 : vector<1x128xf32>
    %388 = math.tanh %387 : vector<1x128xf32>
    %c0_199 = arith.constant 0 : index
    %c0_200 = arith.constant 0 : index
    %389 = vector.load %arg21[%c0_199, %c0_200] : memref<2x128xf32, #tpu.memory_space<vmem>>, vector<1x128xf32>
    tpu.vector_store %arg21[%c0_199, %c0_200], %388 {strides = array<i32>} : memref<2x128xf32, #tpu.memory_space<vmem>>, vector<1x128xf32>,
    %390 = vector.extract_strided_slice %374 {offsets = [8, 0], sizes = [1, 32], strides = [1, 1]} : vector<16x32xf32> to vector<1x32xf32>
    %c0_201 = arith.constant 0 : index
    %c0_202 = arith.constant 0 : index
    %391 = vector.load %arg16[%c0_201, %c0_202] : memref<32x128xf32, #tpu.memory_space<vmem>>, vector<32x128xf32>
    %cst_203 = arith.constant dense<0.000000e+00> : vector<1x128xf32>
    %392 = tpu.matmul %390, %391, %cst_203 {dimension_numbers = #tpu.dot_dimension_numbers<[1], [0], [0], [1], [0, 0, 1, 1], [], []>} : vector<1x32xf32>, vector<32x128xf32>, vector<1x128xf32> -> vector<1x128xf32>
    %c0_204 = arith.constant 0 : index
    %c0_205 = arith.constant 0 : index
    %393 = vector.load %arg17[%c0_204, %c0_205] : memref<1x128xf32, #tpu.memory_space<vmem>>, vector<1x128xf32>
    %394 = arith.addf %392, %393 : vector<1x128xf32>
    %395 = math.tanh %394 : vector<1x128xf32>
    %c1_206 = arith.constant 1 : index
    %c0_207 = arith.constant 0 : index
    %396 = vector.load %arg21[%c1_206, %c0_207] : memref<2x128xf32, #tpu.memory_space<vmem>>, vector<1x128xf32>
    tpu.vector_store %arg21[%c1_206, %c0_207], %395 {strides = array<i32>} : memref<2x128xf32, #tpu.memory_space<vmem>>, vector<1x128xf32>,
    return
  }
}

</mosaic_0001>

<llo_original>
// kernel: bert_word_forward.1
$region0: #{bert_word_forward.1}
  #allocation0 [shape = 'u32[]', space=smem, size = 0x4, offset = 0x4, fixed_abs, tag = 'smem constant byte address 0x4 - core index']
  #allocation1 [shape = 'u32[72,128]{1,0:T(1,128)}', space=vmem, size = 0x9000, scoped, tag = 'internal scratch']
  #allocation2 [shape = 'f32[16,32]{1,0:T(8,128)}', space=vmem, size = 0x2000, scoped, tag = 'scratch operand']
  %s0 = inlined_call_operand.vmem [shape: f32[16,32], index: 0, kind: input, shape index: {}]
  %s1 = inlined_call_operand.vmem [shape: f32[2,1,8], index: 1, kind: input, shape index: {}]
  %s2 = inlined_call_operand.vmem [shape: f32[1,32], index: 2, kind: input, shape index: {}]
  %s3 = inlined_call_operand.vmem [shape: f32[1,32], index: 3, kind: input, shape index: {}]
  %s4 = inlined_call_operand.vmem [shape: f32[2,32,96], index: 4, kind: input, shape index: {}]
  %s5 = inlined_call_operand.vmem [shape: f32[2,1,96], index: 5, kind: input, shape index: {}]
  %s6 = inlined_call_operand.vmem [shape: f32[2,32,32], index: 6, kind: input, shape index: {}]
  %s7 = inlined_call_operand.vmem [shape: f32[2,1,32], index: 7, kind: input, shape index: {}]
  %s8 = inlined_call_operand.vmem [shape: f32[2,1,32], index: 8, kind: input, shape index: {}]
  %s9 = inlined_call_operand.vmem [shape: f32[2,1,32], index: 9, kind: input, shape index: {}]
  %s10 = inlined_call_operand.vmem [shape: f32[2,32,64], index: 10, kind: input, shape index: {}]
  %s11 = inlined_call_operand.vmem [shape: f32[2,1,64], index: 11, kind: input, shape index: {}]
  %s12 = inlined_call_operand.vmem [shape: f32[2,64,32], index: 12, kind: input, shape index: {}]
  %s13 = inlined_call_operand.vmem [shape: f32[2,1,32], index: 13, kind: input, shape index: {}]
  %s14 = inlined_call_operand.vmem [shape: f32[2,1,32], index: 14, kind: input, shape index: {}]
  %s15 = inlined_call_operand.vmem [shape: f32[2,1,32], index: 15, kind: input, shape index: {}]
  %s16 = inlined_call_operand.vmem [shape: f32[32,128], index: 16, kind: input, shape index: {}]
  %s17 = inlined_call_operand.vmem [shape: f32[1,128], index: 17, kind: input, shape index: {}]
  %s18 = inlined_call_operand.vmem [shape: f32[32,128], index: 18, kind: input, shape index: {}]
  %s19 = inlined_call_operand.vmem [shape: f32[1,128], index: 19, kind: input, shape index: {}]
  %s20 = inlined_call_operand.vmem [shape: f32[16,128], index: 20, kind: output, shape index: {0}]
  %s21 = inlined_call_operand.hbm [shape: f32[2,128], index: 21, kind: output, shape index: {1}]
  %22 = xla_tuple %s20, %s21
  %s23 = sld [smem:[#allocation0]]
  $region98: #{bert_word_forward.1} parent=0
    _
  %s25 = ssub.s32 1, %s23
  %s26 = scalar_select 0, %s25, %s23
  $region1: #{bert_word_forward.1} parent=0
    #allocation3 [shape = 'u8[1024]{0}', space=vmem, size = 0x400, scoped, tag = 'output window, operand 1, single buffered']
    #allocation4 [shape = 's32[1]{0}', space=sflag, size = 0x4, scoped, tag = 'scoped memory for bert_word_forward.1']
    %27 = vsyncpa [#allocation4], 0
    // Predicated region
    $region2: #{bert_word_forward.1} parent=1 // pred_check
      _
    $region3: #{bert_word_forward.1} parent=1 // pred_check_branch
      %29 = sbr.rel (0) target = $region5
    $region4: #{bert_word_forward.1} parent=1 // pred_region
      _
    $region5: #{bert_word_forward.1} parent=1 // pred_fallthru
      _
    // Predicated region
    $region6: #{bert_word_forward.1} parent=1 // pred_check
      _
    $region7: #{bert_word_forward.1} parent=1 // pred_check_branch
      %31 = sbr.rel (0) target = $region9
    $region8: #{bert_word_forward.1} parent=1 // pred_region
      _
    $region9: #{bert_word_forward.1} parent=1 // pred_fallthru
      _
    // Predicated region
    $region10: #{bert_word_forward.1} parent=1 // pred_check
      _
    $region11: #{bert_word_forward.1} parent=1 // pred_check_branch
      %33 = sbr.rel (0) target = $region13
    $region12: #{bert_word_forward.1} parent=1 // pred_region
      _
    $region13: #{bert_word_forward.1} parent=1 // pred_fallthru
      _
    // Predicated region
    $region14: #{bert_word_forward.1} parent=1 // pred_check
      _
    $region15: #{bert_word_forward.1} parent=1 // pred_check_branch
      %35 = sbr.rel (0) target = $region17
    $region16: #{bert_word_forward.1} parent=1 // pred_region
      _
    $region17: #{bert_word_forward.1} parent=1 // pred_fallthru
      _
    // Predicated region
    $region18: #{bert_word_forward.1} parent=1 // pred_check
      _
    $region19: #{bert_word_forward.1} parent=1 // pred_check_branch
      %37 = sbr.rel (0) target = $region21
    $region20: #{bert_word_forward.1} parent=1 // pred_region
      _
    $region21: #{bert_word_forward.1} parent=1 // pred_fallthru
      _
    // Predicated region
    $region22: #{bert_word_forward.1} parent=1 // pred_check
      _
    $region23: #{bert_word_forward.1} parent=1 // pred_check_branch
      %39 = sbr.rel (0) target = $region25
    $region24: #{bert_word_forward.1} parent=1 // pred_region
      _
    $region25: #{bert_word_forward.1} parent=1 // pred_fallthru
      _
    // Predicated region
    $region26: #{bert_word_forward.1} parent=1 // pred_check
      _
    $region27: #{bert_word_forward.1} parent=1 // pred_check_branch
      %41 = sbr.rel (0) target = $region29
    $region28: #{bert_word_forward.1} parent=1 // pred_region
      _
    $region29: #{bert_word_forward.1} parent=1 // pred_fallthru
      _
    // Predicated region
    $region30: #{bert_word_forward.1} parent=1 // pred_check
      _
    $region31: #{bert_word_forward.1} parent=1 // pred_check_branch
      %43 = sbr.rel (0) target = $region33
    $region32: #{bert_word_forward.1} parent=1 // pred_region
      _
    $region33: #{bert_word_forward.1} parent=1 // pred_fallthru
      _
    // Predicated region
    $region34: #{bert_word_forward.1} parent=1 // pred_check
      _
    $region35: #{bert_word_forward.1} parent=1 // pred_check_branch
      %45 = sbr.rel (0) target = $region37
    $region36: #{bert_word_forward.1} parent=1 // pred_region
      _
    $region37: #{bert_word_forward.1} parent=1 // pred_fallthru
      _
    // Predicated region
    $region38: #{bert_word_forward.1} parent=1 // pred_check
      _
    $region39: #{bert_word_forward.1} parent=1 // pred_check_branch
      %47 = sbr.rel (0) target = $region41
    $region40: #{bert_word_forward.1} parent=1 // pred_region
      _
    $region41: #{bert_word_forward.1} parent=1 // pred_fallthru
      _
    // Predicated region
    $region42: #{bert_word_forward.1} parent=1 // pred_check
      _
    $region43: #{bert_word_forward.1} parent=1 // pred_check_branch
      %49 = sbr.rel (0) target = $region45
    $region44: #{bert_word_forward.1} parent=1 // pred_region
      _
    $region45: #{bert_word_forward.1} parent=1 // pred_fallthru
      _
    // Predicated region
    $region46: #{bert_word_forward.1} parent=1 // pred_check
      _
    $region47: #{bert_word_forward.1} parent=1 // pred_check_branch
      %51 = sbr.rel (0) target = $region49
    $region48: #{bert_word_forward.1} parent=1 // pred_region
      _
    $region49: #{bert_word_forward.1} parent=1 // pred_fallthru
      _
    // Predicated region
    $region50: #{bert_word_forward.1} parent=1 // pred_check
      _
    $region51: #{bert_word_forward.1} parent=1 // pred_check_branch
      %53 = sbr.rel (0) target = $region53
    $region52: #{bert_word_forward.1} parent=1 // pred_region
      _
    $region53: #{bert_word_forward.1} parent=1 // pred_fallthru
      _
    // Predicated region
    $region54: #{bert_word_forward.1} parent=1 // pred_check
      _
    $region55: #{bert_word_forward.1} parent=1 // pred_check_branch
      %55 = sbr.rel (0) target = $region57
    $region56: #{bert_word_forward.1} parent=1 // pred_region
      _
    $region57: #{bert_word_forward.1} parent=1 // pred_fallthru
      _
    // Predicated region
    $region58: #{bert_word_forward.1} parent=1 // pred_check
      _
    $region59: #{bert_word_forward.1} parent=1 // pred_check_branch
      %57 = sbr.rel (0) target = $region61
    $region60: #{bert_word_forward.1} parent=1 // pred_region
      _
    $region61: #{bert_word_forward.1} parent=1 // pred_fallthru
      _
    // Predicated region
    $region62: #{bert_word_forward.1} parent=1 // pred_check
      _
    $region63: #{bert_word_forward.1} parent=1 // pred_check_branch
      %59 = sbr.rel (0) target = $region65
    $region64: #{bert_word_forward.1} parent=1 // pred_region
      _
    $region65: #{bert_word_forward.1} parent=1 // pred_fallthru
      _
    // Predicated region
    $region66: #{bert_word_forward.1} parent=1 // pred_check
      _
    $region67: #{bert_word_forward.1} parent=1 // pred_check_branch
      %61 = sbr.rel (0) target = $region69
    $region68: #{bert_word_forward.1} parent=1 // pred_region
      _
    $region69: #{bert_word_forward.1} parent=1 // pred_fallthru
      _
    // Predicated region
    $region70: #{bert_word_forward.1} parent=1 // pred_check
      _
    $region71: #{bert_word_forward.1} parent=1 // pred_check_branch
      %63 = sbr.rel (0) target = $region73
    $region72: #{bert_word_forward.1} parent=1 // pred_region
      _
    $region73: #{bert_word_forward.1} parent=1 // pred_fallthru
      _
    // Predicated region
    $region74: #{bert_word_forward.1} parent=1 // pred_check
      _
    $region75: #{bert_word_forward.1} parent=1 // pred_check_branch
      %65 = sbr.rel (0) target = $region77
    $region76: #{bert_word_forward.1} parent=1 // pred_region
      _
    $region77: #{bert_word_forward.1} parent=1 // pred_fallthru
      _
    // Predicated region
    $region78: #{bert_word_forward.1} parent=1 // pred_check
      _
    $region79: #{bert_word_forward.1} parent=1 // pred_check_branch
      %67 = sbr.rel (0) target = $region81
    $region80: #{bert_word_forward.1} parent=1 // pred_region
      _
    $region81: #{bert_word_forward.1} parent=1 // pred_fallthru
      _
    %v68 = vld [vmem:[%s0] sm:$0xff]
    %v69 = vld [vmem:[%s0 + $0x8] sm:$0xff]
    %v70 = vld [vmem:[%s2] sm:$0x1]
    %v71 = vld [vmem:[%s3] sm:$0x1]
    %vm72 = vcmask 261120
    %v73 = vsel %vm72, %v68, 0.0
    %74 = vadd.xlane.f32.xlu0 %v73
    %v75 = vpop.xlane.xlu0 %74
    %v76 = vsel %vm72, %v69, 0.0
    %77 = vadd.xlane.f32.xlu0 %v76
    %v78 = vpop.xlane.xlu0 %77
    %v79 = vrcp.pop 32.0
    %v80 = vmul.f32 32.0, %v79
    %v81 = vsub.f32 1.0, %v80
    %v82 = vmul.f32 %v79, %v81
    %v83 = vadd.f32 %v79, %v82
    %vm84 = vweird.f32 %v79
    %v85 = vsel %vm84, %v79, %v83
    %v86 = vmul.f32 %v75, %v85
    %v87 = vmul.f32 %v78, %v85
    %v88 = vsub.f32 %v68, %v86
    %v89 = vsub.f32 %v69, %v87
    %v90 = vmul.f32 %v88, %v88
    %v91 = vmul.f32 %v89, %v89
    %v92 = vsel %vm72, %v90, 0.0
    %93 = vadd.xlane.f32.xlu0 %v92
    %v94 = vpop.xlane.xlu0 %93
    %v95 = vsel %vm72, %v91, 0.0
    %96 = vadd.xlane.f32.xlu0 %v95
    %v97 = vpop.xlane.xlu0 %96
    %v98 = vmul.f32 %v94, %v85
    %v99 = vmul.f32 %v97, %v85
    %v100 = vadd.f32 %v98, 1e-12
    %v101 = vadd.f32 %v99, 1e-12
    %v102 = vrsqrt.pop %v100
    %v103 = vmul.f32 %v102, %v100
    %v104 = vmul.f32 %v103, %v102
    %v105 = vmul.f32 0.5, %v104
    %v106 = vsub.f32 1.5, %v105
    %v107 = vmul.f32 %v102, %v106
    %vm108 = vweird.f32 %v100
    %vm109 = vweird.f32 %v102
    %vm110 = vmor %vm108, %vm109
    %v111 = vsel %vm110, %v102, %v107
    %v112 = vrsqrt.pop %v101
    %v113 = vmul.f32 %v112, %v101
    %v114 = vmul.f32 %v113, %v112
    %v115 = vmul.f32 0.5, %v114
    %v116 = vsub.f32 1.5, %v115
    %v117 = vmul.f32 %v112, %v116
    %vm118 = vweird.f32 %v101
    %vm119 = vweird.f32 %v112
    %vm120 = vmor %vm118, %vm119
    %v121 = vsel %vm120, %v112, %v117
    %v122 = vmul.f32 %v88, %v111
    %v123 = vmul.f32 %v89, %v121
    %v125 = vperm.slane %v70, 0
    %v127 = vmul.f32 %v122, %v125
    %v128 = vmul.f32 %v123, %v125
    %v130 = vperm.slane %v71, 0
    %v132 = vadd.f32 %v127, %v130
    %v133 = vadd.f32 %v128, %v130
    %v134 = vld [vmem:[%s4] sm:$0xff]
    %v135 = vld [vmem:[%s4 + $0x8] sm:$0xff]
    %v136 = vld [vmem:[%s4 + $0x10] sm:$0xff]
    %v137 = vld [vmem:[%s4 + $0x18] sm:$0xff]
    %v138 = vld [vmem:[%s5] sm:$0x1]
    %v140 = vperm.slane %v138, 0
    %v143 = vsel %vm72, %v132, 0
    %v146 = vsel %vm72, %v133, 0
    %148 = vmatpush.msra.mxu0 0.0
    %149 = vmatpush.msra.mxu0 0.0
    %150 = vmatpush.msra.mxu0 0.0
    %151 = vmatpush.msra.mxu0 0.0
    %152 = vmatpush.msra.mxu0 0.0
    %153 = vmatpush.msra.mxu0 0.0
    %154 = vmatpush.msra.mxu0 0.0
    %155 = vmatpush.msra.mxu0 0.0
    %156 = vmatpush.msra.mxu0 0.0
    %157 = vmatpush.msra.mxu0 0.0
    %158 = vmatpush.msra.mxu0 0.0
    %159 = vmatpush.msra.mxu0 0.0
    %160 = vmatpush.msra.mxu0 %v137
    %161 = vmatpush.msra.mxu0 %v136
    %162 = vmatpush.msra.mxu0 %v135
    %163 = vmatpush.msra.mxu0 %v134
    %164 = vmatmul.f32.gmra.mxu0 %v143
    %v165 = vpop.f32.mrf.mxu0
    %v166 = vadd.f32 %v140, %v165
    %167 = vmatmul.f32.gmra.mxu0 %v146
    %v168 = vpop.f32.mrf.mxu0
    %v169 = vadd.f32 %v140, %v168
    %170 = vdwg.mxu0
    %v171 = vld [vmem:[%s1] sm:$0x1]
    %173 = vrot.lane.b32.xlu0 %v166, 96
    %v174 = vpop.permute.xlu0 %173
    %vm175 = vcmask 130048
    %v176 = vsel %vm175, %v166, 0
    %v178 = vsel %vm175, %v174, 0
    %180 = vmatpush.xpose.msra.mxu0 0.0
    %181 = vmatpush.xpose.msra.mxu0 0.0
    %182 = vmatpush.xpose.msra.mxu0 0.0
    %183 = vmatpush.xpose.msra.mxu0 0.0
    %184 = vmatpush.xpose.msra.mxu0 0.0
    %185 = vmatpush.xpose.msra.mxu0 0.0
    %186 = vmatpush.xpose.msra.mxu0 0.0
    %187 = vmatpush.xpose.msra.mxu0 0.0
    %188 = vmatpush.xpose.msra.mxu0 0.0
    %189 = vmatpush.xpose.msra.mxu0 0.0
    %190 = vmatpush.xpose.msra.mxu0 0.0
    %191 = vmatpush.xpose.msra.mxu0 0.0
    %192 = vmatpush.xpose.msra.mxu0 0.0
    %193 = vmatpush.xpose.msra.mxu0 0.0
    %194 = vmatpush.xpose.msra.mxu0 0.0
    %195 = vmatpush.xpose.msra.mxu0 %v178
    %196 = vmatmul.f32.gmra.mxu0 %v176
    %v197 = vpop.f32.mrf.mxu0
    %v198 = vadd.f32 0.0, %v197
    %199 = vdwg.mxu0
    %v200 = vmul.f32 %v198, 0.25
    %v202 = vperm.slane %v171, 0
    %v204 = vadd.f32 %v200, %v202
    %vm205 = vcmask 64512
    %v206 = vsel %vm205, %v204, -inf
    %207 = vmax.xlane.f32.xlu0 %v206
    %v208 = vpop.xlane.xlu0 %207
    %v209 = vsub.f32 %v204, %v208
    %v210 = vmul.f32 %v209, 1.442695
    %v211 = vpow.pop %v210
    %v212 = vsel %vm205, %v211, 0.0
    %213 = vadd.xlane.f32.xlu0 %v212
    %v214 = vpop.xlane.xlu0 %213
    %v215 = vrcp.pop %v214
    %v216 = vmul.f32 %v211, %v215
    %217 = vrot.lane.b32.xlu0 %v166, 64
    %v218 = vpop.permute.xlu0 %217
    %v221 = vsel %vm205, %v216, 0
    %223 = vmatpush.msra.mxu0 0.0
    %224 = vmatpush.msra.mxu0 0.0
    %225 = vmatpush.msra.mxu0 0.0
    %226 = vmatpush.msra.mxu0 0.0
    %227 = vmatpush.msra.mxu0 0.0
    %228 = vmatpush.msra.mxu0 0.0
    %229 = vmatpush.msra.mxu0 0.0
    %230 = vmatpush.msra.mxu0 0.0
    %231 = vmatpush.msra.mxu0 0.0
    %232 = vmatpush.msra.mxu0 0.0
    %233 = vmatpush.msra.mxu0 0.0
    %234 = vmatpush.msra.mxu0 0.0
    %235 = vmatpush.msra.mxu0 0.0
    %236 = vmatpush.msra.mxu0 0.0
    %237 = vmatpush.msra.mxu0 0.0
    %238 = vmatpush.msra.mxu0 %v218
    %239 = vmatmul.f32.gmra.mxu0 %v221
    %v240 = vpop.f32.mrf.mxu0
    %v241 = vadd.f32 0.0, %v240
    %242 = vdwg.mxu0
    %243 = vst.msk [vmem:[#allocation2] sm:$0xff] %vm175, %v241
    %244 = vrot.lane.b32.xlu0 %v166, 112
    %v245 = vpop.permute.xlu0 %244
    %246 = vrot.lane.b32.xlu0 %v166, 80
    %v247 = vpop.permute.xlu0 %246
    %v248 = vsel %vm175, %v245, 0
    %v250 = vsel %vm175, %v247, 0
    %252 = vmatpush.xpose.msra.mxu0 0.0
    %253 = vmatpush.xpose.msra.mxu0 0.0
    %254 = vmatpush.xpose.msra.mxu0 0.0
    %255 = vmatpush.xpose.msra.mxu0 0.0
    %256 = vmatpush.xpose.msra.mxu0 0.0
    %257 = vmatpush.xpose.msra.mxu0 0.0
    %258 = vmatpush.xpose.msra.mxu0 0.0
    %259 = vmatpush.xpose.msra.mxu0 0.0
    %260 = vmatpush.xpose.msra.mxu0 0.0
    %261 = vmatpush.xpose.msra.mxu0 0.0
    %262 = vmatpush.xpose.msra.mxu0 0.0
    %263 = vmatpush.xpose.msra.mxu0 0.0
    %264 = vmatpush.xpose.msra.mxu0 0.0
    %265 = vmatpush.xpose.msra.mxu0 0.0
    %266 = vmatpush.xpose.msra.mxu0 0.0
    %267 = vmatpush.xpose.msra.mxu0 %v250
    %268 = vmatmul.f32.gmra.mxu0 %v248
    %v269 = vpop.f32.mrf.mxu0
    %v270 = vadd.f32 0.0, %v269
    %271 = vdwg.mxu0
    %v272 = vmul.f32 %v270, 0.25
    %v273 = vadd.f32 %v272, %v202
    %v274 = vsel %vm205, %v273, -inf
    %275 = vmax.xlane.f32.xlu0 %v274
    %v276 = vpop.xlane.xlu0 %275
    %v277 = vsub.f32 %v273, %v276
    %v278 = vmul.f32 %v277, 1.442695
    %v279 = vpow.pop %v278
    %v280 = vsel %vm205, %v279, 0.0
    %281 = vadd.xlane.f32.xlu0 %v280
    %v282 = vpop.xlane.xlu0 %281
    %v283 = vrcp.pop %v282
    %v284 = vmul.f32 %v279, %v283
    %285 = vrot.lane.b32.xlu0 %v166, 48
    %v286 = vpop.permute.xlu0 %285
    %v289 = vsel %vm205, %v284, 0
    %291 = vmatpush.msra.mxu0 0.0
    %292 = vmatpush.msra.mxu0 0.0
    %293 = vmatpush.msra.mxu0 0.0
    %294 = vmatpush.msra.mxu0 0.0
    %295 = vmatpush.msra.mxu0 0.0
    %296 = vmatpush.msra.mxu0 0.0
    %297 = vmatpush.msra.mxu0 0.0
    %298 = vmatpush.msra.mxu0 0.0
    %299 = vmatpush.msra.mxu0 0.0
    %300 = vmatpush.msra.mxu0 0.0
    %301 = vmatpush.msra.mxu0 0.0
    %302 = vmatpush.msra.mxu0 0.0
    %303 = vmatpush.msra.mxu0 0.0
    %304 = vmatpush.msra.mxu0 0.0
    %305 = vmatpush.msra.mxu0 0.0
    %306 = vmatpush.msra.mxu0 %v286
    %307 = vmatmul.f32.gmra.mxu0 %v289
    %v308 = vpop.f32.mrf.mxu0
    %v309 = vadd.f32 0.0, %v308
    %310 = vdwg.mxu0
    %312 = vrot.lane.b32.xlu0 %v309, 16
    %v313 = vpop.permute.xlu0 %312
    %vm315 = vcmask 261248
    %316 = vst.msk [vmem:[#allocation2] sm:$0xff] %vm315, %v313
    %s317 = scalar_lea.vmem %s1, 1
    %v318 = vld [vmem:[%s317] sm:$0x1]
    %320 = vrot.lane.b32.xlu0 %v169, 96
    %v321 = vpop.permute.xlu0 %320
    %v322 = vsel %vm175, %v169, 0
    %v324 = vsel %vm175, %v321, 0
    %326 = vmatpush.xpose.msra.mxu0 0.0
    %327 = vmatpush.xpose.msra.mxu0 0.0
    %328 = vmatpush.xpose.msra.mxu0 0.0
    %329 = vmatpush.xpose.msra.mxu0 0.0
    %330 = vmatpush.xpose.msra.mxu0 0.0
    %331 = vmatpush.xpose.msra.mxu0 0.0
    %332 = vmatpush.xpose.msra.mxu0 0.0
    %333 = vmatpush.xpose.msra.mxu0 0.0
    %334 = vmatpush.xpose.msra.mxu0 0.0
    %335 = vmatpush.xpose.msra.mxu0 0.0
    %336 = vmatpush.xpose.msra.mxu0 0.0
    %337 = vmatpush.xpose.msra.mxu0 0.0
    %338 = vmatpush.xpose.msra.mxu0 0.0
    %339 = vmatpush.xpose.msra.mxu0 0.0
    %340 = vmatpush.xpose.msra.mxu0 0.0
    %341 = vmatpush.xpose.msra.mxu0 %v324
    %342 = vmatmul.f32.gmra.mxu0 %v322
    %v343 = vpop.f32.mrf.mxu0
    %v344 = vadd.f32 0.0, %v343
    %345 = vdwg.mxu0
    %v346 = vmul.f32 %v344, 0.25
    %v348 = vperm.slane %v318, 0
    %v350 = vadd.f32 %v346, %v348
    %v351 = vsel %vm205, %v350, -inf
    %352 = vmax.xlane.f32.xlu0 %v351
    %v353 = vpop.xlane.xlu0 %352
    %v354 = vsub.f32 %v350, %v353
    %v355 = vmul.f32 %v354, 1.442695
    %v356 = vpow.pop %v355
    %v357 = vsel %vm205, %v356, 0.0
    %358 = vadd.xlane.f32.xlu0 %v357
    %v359 = vpop.xlane.xlu0 %358
    %v360 = vrcp.pop %v359
    %v361 = vmul.f32 %v356, %v360
    %362 = vrot.lane.b32.xlu0 %v169, 64
    %v363 = vpop.permute.xlu0 %362
    %v366 = vsel %vm205, %v361, 0
    %368 = vmatpush.msra.mxu0 0.0
    %369 = vmatpush.msra.mxu0 0.0
    %370 = vmatpush.msra.mxu0 0.0
    %371 = vmatpush.msra.mxu0 0.0
    %372 = vmatpush.msra.mxu0 0.0
    %373 = vmatpush.msra.mxu0 0.0
    %374 = vmatpush.msra.mxu0 0.0
    %375 = vmatpush.msra.mxu0 0.0
    %376 = vmatpush.msra.mxu0 0.0
    %377 = vmatpush.msra.mxu0 0.0
    %378 = vmatpush.msra.mxu0 0.0
    %379 = vmatpush.msra.mxu0 0.0
    %380 = vmatpush.msra.mxu0 0.0
    %381 = vmatpush.msra.mxu0 0.0
    %382 = vmatpush.msra.mxu0 0.0
    %383 = vmatpush.msra.mxu0 %v363
    %384 = vmatmul.f32.gmra.mxu0 %v366
    %v385 = vpop.f32.mrf.mxu0
    %v386 = vadd.f32 0.0, %v385
    %387 = vdwg.mxu0
    %388 = vst.msk [vmem:[#allocation2 + $0x8] sm:$0xff] %vm175, %v386
    %389 = vrot.lane.b32.xlu0 %v169, 112
    %v390 = vpop.permute.xlu0 %389
    %391 = vrot.lane.b32.xlu0 %v169, 80
    %v392 = vpop.permute.xlu0 %391
    %v393 = vsel %vm175, %v390, 0
    %v395 = vsel %vm175, %v392, 0
    %397 = vmatpush.xpose.msra.mxu0 0.0
    %398 = vmatpush.xpose.msra.mxu0 0.0
    %399 = vmatpush.xpose.msra.mxu0 0.0
    %400 = vmatpush.xpose.msra.mxu0 0.0
    %401 = vmatpush.xpose.msra.mxu0 0.0
    %402 = vmatpush.xpose.msra.mxu0 0.0
    %403 = vmatpush.xpose.msra.mxu0 0.0
    %404 = vmatpush.xpose.msra.mxu0 0.0
    %405 = vmatpush.xpose.msra.mxu0 0.0
    %406 = vmatpush.xpose.msra.mxu0 0.0
    %407 = vmatpush.xpose.msra.mxu0 0.0
    %408 = vmatpush.xpose.msra.mxu0 0.0
    %409 = vmatpush.xpose.msra.mxu0 0.0
    %410 = vmatpush.xpose.msra.mxu0 0.0
    %411 = vmatpush.xpose.msra.mxu0 0.0
    %412 = vmatpush.xpose.msra.mxu0 %v395
    %413 = vmatmul.f32.gmra.mxu0 %v393
    %v414 = vpop.f32.mrf.mxu0
    %v415 = vadd.f32 0.0, %v414
    %416 = vdwg.mxu0
    %v417 = vmul.f32 %v415, 0.25
    %v418 = vadd.f32 %v417, %v348
    %v419 = vsel %vm205, %v418, -inf
    %420 = vmax.xlane.f32.xlu0 %v419
    %v421 = vpop.xlane.xlu0 %420
    %v422 = vsub.f32 %v418, %v421
    %v423 = vmul.f32 %v422, 1.442695
    %v424 = vpow.pop %v423
    %v425 = vsel %vm205, %v424, 0.0
    %426 = vadd.xlane.f32.xlu0 %v425
    %v427 = vpop.xlane.xlu0 %426
    %v428 = vrcp.pop %v427
    %v429 = vmul.f32 %v424, %v428
    %430 = vrot.lane.b32.xlu0 %v169, 48
    %v431 = vpop.permute.xlu0 %430
    %v434 = vsel %vm205, %v429, 0
    %436 = vmatpush.msra.mxu0 0.0
    %437 = vmatpush.msra.mxu0 0.0
    %438 = vmatpush.msra.mxu0 0.0
    %439 = vmatpush.msra.mxu0 0.0
    %440 = vmatpush.msra.mxu0 0.0
    %441 = vmatpush.msra.mxu0 0.0
    %442 = vmatpush.msra.mxu0 0.0
    %443 = vmatpush.msra.mxu0 0.0
    %444 = vmatpush.msra.mxu0 0.0
    %445 = vmatpush.msra.mxu0 0.0
    %446 = vmatpush.msra.mxu0 0.0
    %447 = vmatpush.msra.mxu0 0.0
    %448 = vmatpush.msra.mxu0 0.0
    %449 = vmatpush.msra.mxu0 0.0
    %450 = vmatpush.msra.mxu0 0.0
    %451 = vmatpush.msra.mxu0 %v431
    %452 = vmatmul.f32.gmra.mxu0 %v434
    %v453 = vpop.f32.mrf.mxu0
    %v454 = vadd.f32 0.0, %v453
    %455 = vdwg.mxu0
    %457 = vrot.lane.b32.xlu0 %v454, 16
    %v458 = vpop.permute.xlu0 %457
    %460 = vst.msk [vmem:[#allocation2 + $0x8] sm:$0xff] %vm315, %v458
    %v461 = vld [vmem:[#allocation2] sm:$0xff]
    %v462 = vld [vmem:[#allocation2 + $0x8] sm:$0xff]
    %v463 = vld [vmem:[%s6] sm:$0xff]
    %v464 = vld [vmem:[%s6 + $0x8] sm:$0xff]
    %v465 = vld [vmem:[%s6 + $0x10] sm:$0xff]
    %v466 = vld [vmem:[%s6 + $0x18] sm:$0xff]
    %v467 = vld [vmem:[%s7] sm:$0x1]
    %v469 = vperm.slane %v467, 0
    %v472 = vsel %vm72, %v461, 0
    %v475 = vsel %vm72, %v462, 0
    %477 = vmatpush.msra.mxu0 0.0
    %478 = vmatpush.msra.mxu0 0.0
    %479 = vmatpush.msra.mxu0 0.0
    %480 = vmatpush.msra.mxu0 0.0
    %481 = vmatpush.msra.mxu0 0.0
    %482 = vmatpush.msra.mxu0 0.0
    %483 = vmatpush.msra.mxu0 0.0
    %484 = vmatpush.msra.mxu0 0.0
    %485 = vmatpush.msra.mxu0 0.0
    %486 = vmatpush.msra.mxu0 0.0
    %487 = vmatpush.msra.mxu0 0.0
    %488 = vmatpush.msra.mxu0 0.0
    %489 = vmatpush.msra.mxu0 %v466
    %490 = vmatpush.msra.mxu0 %v465
    %491 = vmatpush.msra.mxu0 %v464
    %492 = vmatpush.msra.mxu0 %v463
    %493 = vmatmul.f32.gmra.mxu0 %v472
    %v494 = vpop.f32.mrf.mxu0
    %v495 = vadd.f32 %v469, %v494
    %496 = vmatmul.f32.gmra.mxu0 %v475
    %v497 = vpop.f32.mrf.mxu0
    %v498 = vadd.f32 %v469, %v497
    %499 = vdwg.mxu0
    %v500 = vadd.f32 %v495, %v132
    %v501 = vadd.f32 %v498, %v133
    %v502 = vld [vmem:[%s8] sm:$0x1]
    %v503 = vld [vmem:[%s9] sm:$0x1]
    %v504 = vsel %vm72, %v500, 0.0
    %505 = vadd.xlane.f32.xlu0 %v504
    %v506 = vpop.xlane.xlu0 %505
    %v507 = vsel %vm72, %v501, 0.0
    %508 = vadd.xlane.f32.xlu0 %v507
    %v509 = vpop.xlane.xlu0 %508
    %v510 = vmul.f32 %v506, %v85
    %v511 = vmul.f32 %v509, %v85
    %v512 = vsub.f32 %v500, %v510
    %v513 = vsub.f32 %v501, %v511
    %v514 = vmul.f32 %v512, %v512
    %v515 = vmul.f32 %v513, %v513
    %v516 = vsel %vm72, %v514, 0.0
    %517 = vadd.xlane.f32.xlu0 %v516
    %v518 = vpop.xlane.xlu0 %517
    %v519 = vsel %vm72, %v515, 0.0
    %520 = vadd.xlane.f32.xlu0 %v519
    %v521 = vpop.xlane.xlu0 %520
    %v522 = vmul.f32 %v518, %v85
    %v523 = vmul.f32 %v521, %v85
    %v524 = vadd.f32 %v522, 1e-12
    %v525 = vadd.f32 %v523, 1e-12
    %v526 = vrsqrt.pop %v524
    %v527 = vmul.f32 %v526, %v524
    %v528 = vmul.f32 %v527, %v526
    %v529 = vmul.f32 0.5, %v528
    %v530 = vsub.f32 1.5, %v529
    %v531 = vmul.f32 %v526, %v530
    %vm532 = vweird.f32 %v524
    %vm533 = vweird.f32 %v526
    %vm534 = vmor %vm532, %vm533
    %v535 = vsel %vm534, %v526, %v531
    %v536 = vrsqrt.pop %v525
    %v537 = vmul.f32 %v536, %v525
    %v538 = vmul.f32 %v537, %v536
    %v539 = vmul.f32 0.5, %v538
    %v540 = vsub.f32 1.5, %v539
    %v541 = vmul.f32 %v536, %v540
    %vm542 = vweird.f32 %v525
    %vm543 = vweird.f32 %v536
    %vm544 = vmor %vm542, %vm543
    %v545 = vsel %vm544, %v536, %v541
    %v546 = vmul.f32 %v512, %v535
    %v547 = vmul.f32 %v513, %v545
    %v549 = vperm.slane %v502, 0
    %v551 = vmul.f32 %v546, %v549
    %v552 = vmul.f32 %v547, %v549
    %v554 = vperm.slane %v503, 0
    %v556 = vadd.f32 %v551, %v554
    %v557 = vadd.f32 %v552, %v554
    %v558 = vld [vmem:[%s10] sm:$0xff]
    %v559 = vld [vmem:[%s10 + $0x8] sm:$0xff]
    %v560 = vld [vmem:[%s10 + $0x10] sm:$0xff]
    %v561 = vld [vmem:[%s10 + $0x18] sm:$0xff]
    %v562 = vld [vmem:[%s11] sm:$0x1]
    %v564 = vperm.slane %v562, 0
    %v567 = vsel %vm72, %v556, 0
    %v570 = vsel %vm72, %v557, 0
    %572 = vmatpush.msra.mxu0 0.0
    %573 = vmatpush.msra.mxu0 0.0
    %574 = vmatpush.msra.mxu0 0.0
    %575 = vmatpush.msra.mxu0 0.0
    %576 = vmatpush.msra.mxu0 0.0
    %577 = vmatpush.msra.mxu0 0.0
    %578 = vmatpush.msra.mxu0 0.0
    %579 = vmatpush.msra.mxu0 0.0
    %580 = vmatpush.msra.mxu0 0.0
    %581 = vmatpush.msra.mxu0 0.0
    %582 = vmatpush.msra.mxu0 0.0
    %583 = vmatpush.msra.mxu0 0.0
    %584 = vmatpush.msra.mxu0 %v561
    %585 = vmatpush.msra.mxu0 %v560
    %586 = vmatpush.msra.mxu0 %v559
    %587 = vmatpush.msra.mxu0 %v558
    %588 = vmatmul.f32.gmra.mxu0 %v567
    %v589 = vpop.f32.mrf.mxu0
    %v590 = vadd.f32 %v564, %v589
    %591 = vmatmul.f32.gmra.mxu0 %v570
    %v592 = vpop.f32.mrf.mxu0
    %v593 = vadd.f32 %v564, %v592
    %594 = vdwg.mxu0
    %v595 = vmul.f32 %v590, 0.5
    %v596 = vmul.f32 %v593, 0.5
    %v597 = vmul.f32 %v590, 0.044715
    %v598 = vmul.f32 %v593, 0.044715
    %v599 = vmul.f32 %v597, %v590
    %v600 = vmul.f32 %v598, %v593
    %v601 = vmul.f32 %v599, %v590
    %v602 = vmul.f32 %v600, %v593
    %v603 = vadd.f32 %v590, %v601
    %v604 = vadd.f32 %v593, %v602
    %v605 = vmul.f32 %v603, 0.7978846
    %v606 = vmul.f32 %v604, 0.7978846
    %v607 = vtanh.pop %v605
    %v608 = vtanh.pop %v606
    %v609 = vadd.f32 %v607, 1.0
    %v610 = vadd.f32 %v608, 1.0
    %v611 = vmul.f32 %v595, %v609
    %v612 = vmul.f32 %v596, %v610
    %v613 = vld [vmem:[%s12] sm:$0xff]
    %v614 = vld [vmem:[%s12 + $0x8] sm:$0xff]
    %v615 = vld [vmem:[%s12 + $0x10] sm:$0xff]
    %v616 = vld [vmem:[%s12 + $0x18] sm:$0xff]
    %v617 = vld [vmem:[%s12 + $0x20] sm:$0xff]
    %v618 = vld [vmem:[%s12 + $0x28] sm:$0xff]
    %v619 = vld [vmem:[%s12 + $0x30] sm:$0xff]
    %v620 = vld [vmem:[%s12 + $0x38] sm:$0xff]
    %v621 = vld [vmem:[%s13] sm:$0x1]
    %v623 = vperm.slane %v621, 0
    %vm625 = vcmask 523264
    %v627 = vsel %vm625, %v611, 0
    %v630 = vsel %vm625, %v612, 0
    %632 = vmatpush.msra.mxu0 0.0
    %633 = vmatpush.msra.mxu0 0.0
    %634 = vmatpush.msra.mxu0 0.0
    %635 = vmatpush.msra.mxu0 0.0
    %636 = vmatpush.msra.mxu0 0.0
    %637 = vmatpush.msra.mxu0 0.0
    %638 = vmatpush.msra.mxu0 0.0
    %639 = vmatpush.msra.mxu0 0.0
    %640 = vmatpush.msra.mxu0 %v620
    %641 = vmatpush.msra.mxu0 %v619
    %642 = vmatpush.msra.mxu0 %v618
    %643 = vmatpush.msra.mxu0 %v617
    %644 = vmatpush.msra.mxu0 %v616
    %645 = vmatpush.msra.mxu0 %v615
    %646 = vmatpush.msra.mxu0 %v614
    %647 = vmatpush.msra.mxu0 %v613
    %648 = vmatmul.f32.gmra.mxu0 %v627
    %v649 = vpop.f32.mrf.mxu0
    %v650 = vadd.f32 %v623, %v649
    %651 = vmatmul.f32.gmra.mxu0 %v630
    %v652 = vpop.f32.mrf.mxu0
    %v653 = vadd.f32 %v623, %v652
    %654 = vdwg.mxu0
    %v655 = vadd.f32 %v650, %v556
    %v656 = vadd.f32 %v653, %v557
    %v657 = vld [vmem:[%s14] sm:$0x1]
    %v658 = vld [vmem:[%s15] sm:$0x1]
    %v659 = vsel %vm72, %v655, 0.0
    %660 = vadd.xlane.f32.xlu0 %v659
    %v661 = vpop.xlane.xlu0 %660
    %v662 = vsel %vm72, %v656, 0.0
    %663 = vadd.xlane.f32.xlu0 %v662
    %v664 = vpop.xlane.xlu0 %663
    %v665 = vmul.f32 %v661, %v85
    %v666 = vmul.f32 %v664, %v85
    %v667 = vsub.f32 %v655, %v665
    %v668 = vsub.f32 %v656, %v666
    %v669 = vmul.f32 %v667, %v667
    %v670 = vmul.f32 %v668, %v668
    %v671 = vsel %vm72, %v669, 0.0
    %672 = vadd.xlane.f32.xlu0 %v671
    %v673 = vpop.xlane.xlu0 %672
    %v674 = vsel %vm72, %v670, 0.0
    %675 = vadd.xlane.f32.xlu0 %v674
    %v676 = vpop.xlane.xlu0 %675
    %v677 = vmul.f32 %v673, %v85
    %v678 = vmul.f32 %v676, %v85
    %v679 = vadd.f32 %v677, 1e-12
    %v680 = vadd.f32 %v678, 1e-12
    %v681 = vrsqrt.pop %v679
    %v682 = vmul.f32 %v681, %v679
    %v683 = vmul.f32 %v682, %v681
    %v684 = vmul.f32 0.5, %v683
    %v685 = vsub.f32 1.5, %v684
    %v686 = vmul.f32 %v681, %v685
    %vm687 = vweird.f32 %v679
    %vm688 = vweird.f32 %v681
    %vm689 = vmor %vm687, %vm688
    %v690 = vsel %vm689, %v681, %v686
    %v691 = vrsqrt.pop %v680
    %v692 = vmul.f32 %v691, %v680
    %v693 = vmul.f32 %v692, %v691
    %v694 = vmul.f32 0.5, %v693
    %v695 = vsub.f32 1.5, %v694
    %v696 = vmul.f32 %v691, %v695
    %vm697 = vweird.f32 %v680
    %vm698 = vweird.f32 %v691
    %vm699 = vmor %vm697, %vm698
    %v700 = vsel %vm699, %v691, %v696
    %v701 = vmul.f32 %v667, %v690
    %v702 = vmul.f32 %v668, %v700
    %v704 = vperm.slane %v657, 0
    %v706 = vmul.f32 %v701, %v704
    %v707 = vmul.f32 %v702, %v704
    %v709 = vperm.slane %v658, 0
    %v711 = vadd.f32 %v706, %v709
    %v712 = vadd.f32 %v707, %v709
    %s713 = scalar_lea.vmem %s4, 32
    %v714 = vld [vmem:[%s713] sm:$0xff]
    %v715 = vld [vmem:[%s713 + $0x8] sm:$0xff]
    %v716 = vld [vmem:[%s713 + $0x10] sm:$0xff]
    %v717 = vld [vmem:[%s713 + $0x18] sm:$0xff]
    %s718 = scalar_lea.vmem %s5, 1
    %v719 = vld [vmem:[%s718] sm:$0x1]
    %v721 = vperm.slane %v719, 0
    %v724 = vsel %vm72, %v711, 0
    %v727 = vsel %vm72, %v712, 0
    %729 = vmatpush.msra.mxu0 0.0
    %730 = vmatpush.msra.mxu0 0.0
    %731 = vmatpush.msra.mxu0 0.0
    %732 = vmatpush.msra.mxu0 0.0
    %733 = vmatpush.msra.mxu0 0.0
    %734 = vmatpush.msra.mxu0 0.0
    %735 = vmatpush.msra.mxu0 0.0
    %736 = vmatpush.msra.mxu0 0.0
    %737 = vmatpush.msra.mxu0 0.0
    %738 = vmatpush.msra.mxu0 0.0
    %739 = vmatpush.msra.mxu0 0.0
    %740 = vmatpush.msra.mxu0 0.0
    %741 = vmatpush.msra.mxu0 %v717
    %742 = vmatpush.msra.mxu0 %v716
    %743 = vmatpush.msra.mxu0 %v715
    %744 = vmatpush.msra.mxu0 %v714
    %745 = vmatmul.f32.gmra.mxu0 %v724
    %v746 = vpop.f32.mrf.mxu0
    %v747 = vadd.f32 %v721, %v746
    %748 = vmatmul.f32.gmra.mxu0 %v727
    %v749 = vpop.f32.mrf.mxu0
    %v750 = vadd.f32 %v721, %v749
    %751 = vdwg.mxu0
    %v752 = vld [vmem:[%s1] sm:$0x1]
    %754 = vrot.lane.b32.xlu0 %v747, 96
    %v755 = vpop.permute.xlu0 %754
    %v756 = vsel %vm175, %v747, 0
    %v758 = vsel %vm175, %v755, 0
    %760 = vmatpush.xpose.msra.mxu0 0.0
    %761 = vmatpush.xpose.msra.mxu0 0.0
    %762 = vmatpush.xpose.msra.mxu0 0.0
    %763 = vmatpush.xpose.msra.mxu0 0.0
    %764 = vmatpush.xpose.msra.mxu0 0.0
    %765 = vmatpush.xpose.msra.mxu0 0.0
    %766 = vmatpush.xpose.msra.mxu0 0.0
    %767 = vmatpush.xpose.msra.mxu0 0.0
    %768 = vmatpush.xpose.msra.mxu0 0.0
    %769 = vmatpush.xpose.msra.mxu0 0.0
    %770 = vmatpush.xpose.msra.mxu0 0.0
    %771 = vmatpush.xpose.msra.mxu0 0.0
    %772 = vmatpush.xpose.msra.mxu0 0.0
    %773 = vmatpush.xpose.msra.mxu0 0.0
    %774 = vmatpush.xpose.msra.mxu0 0.0
    %775 = vmatpush.xpose.msra.mxu0 %v758
    %776 = vmatmul.f32.gmra.mxu0 %v756
    %v777 = vpop.f32.mrf.mxu0
    %v778 = vadd.f32 0.0, %v777
    %779 = vdwg.mxu0
    %v780 = vmul.f32 %v778, 0.25
    %v782 = vperm.slane %v752, 0
    %v784 = vadd.f32 %v780, %v782
    %v785 = vsel %vm205, %v784, -inf
    %786 = vmax.xlane.f32.xlu0 %v785
    %v787 = vpop.xlane.xlu0 %786
    %v788 = vsub.f32 %v784, %v787
    %v789 = vmul.f32 %v788, 1.442695
    %v790 = vpow.pop %v789
    %v791 = vsel %vm205, %v790, 0.0
    %792 = vadd.xlane.f32.xlu0 %v791
    %v793 = vpop.xlane.xlu0 %792
    %v794 = vrcp.pop %v793
    %v795 = vmul.f32 %v790, %v794
    %796 = vrot.lane.b32.xlu0 %v747, 64
    %v797 = vpop.permute.xlu0 %796
    %v800 = vsel %vm205, %v795, 0
    %802 = vmatpush.msra.mxu0 0.0
    %803 = vmatpush.msra.mxu0 0.0
    %804 = vmatpush.msra.mxu0 0.0
    %805 = vmatpush.msra.mxu0 0.0
    %806 = vmatpush.msra.mxu0 0.0
    %807 = vmatpush.msra.mxu0 0.0
    %808 = vmatpush.msra.mxu0 0.0
    %809 = vmatpush.msra.mxu0 0.0
    %810 = vmatpush.msra.mxu0 0.0
    %811 = vmatpush.msra.mxu0 0.0
    %812 = vmatpush.msra.mxu0 0.0
    %813 = vmatpush.msra.mxu0 0.0
    %814 = vmatpush.msra.mxu0 0.0
    %815 = vmatpush.msra.mxu0 0.0
    %816 = vmatpush.msra.mxu0 0.0
    %817 = vmatpush.msra.mxu0 %v797
    %818 = vmatmul.f32.gmra.mxu0 %v800
    %v819 = vpop.f32.mrf.mxu0
    %v820 = vadd.f32 0.0, %v819
    %821 = vdwg.mxu0
    %822 = vst.msk [vmem:[#allocation2] sm:$0xff] %vm175, %v820
    %823 = vrot.lane.b32.xlu0 %v747, 112
    %v824 = vpop.permute.xlu0 %823
    %825 = vrot.lane.b32.xlu0 %v747, 80
    %v826 = vpop.permute.xlu0 %825
    %v827 = vsel %vm175, %v824, 0
    %v829 = vsel %vm175, %v826, 0
    %831 = vmatpush.xpose.msra.mxu0 0.0
    %832 = vmatpush.xpose.msra.mxu0 0.0
    %833 = vmatpush.xpose.msra.mxu0 0.0
    %834 = vmatpush.xpose.msra.mxu0 0.0
    %835 = vmatpush.xpose.msra.mxu0 0.0
    %836 = vmatpush.xpose.msra.mxu0 0.0
    %837 = vmatpush.xpose.msra.mxu0 0.0
    %838 = vmatpush.xpose.msra.mxu0 0.0
    %839 = vmatpush.xpose.msra.mxu0 0.0
    %840 = vmatpush.xpose.msra.mxu0 0.0
    %841 = vmatpush.xpose.msra.mxu0 0.0
    %842 = vmatpush.xpose.msra.mxu0 0.0
    %843 = vmatpush.xpose.msra.mxu0 0.0
    %844 = vmatpush.xpose.msra.mxu0 0.0
    %845 = vmatpush.xpose.msra.mxu0 0.0
    %846 = vmatpush.xpose.msra.mxu0 %v829
    %847 = vmatmul.f32.gmra.mxu0 %v827
    %v848 = vpop.f32.mrf.mxu0
    %v849 = vadd.f32 0.0, %v848
    %850 = vdwg.mxu0
    %v851 = vmul.f32 %v849, 0.25
    %v852 = vadd.f32 %v851, %v782
    %v853 = vsel %vm205, %v852, -inf
    %854 = vmax.xlane.f32.xlu0 %v853
    %v855 = vpop.xlane.xlu0 %854
    %v856 = vsub.f32 %v852, %v855
    %v857 = vmul.f32 %v856, 1.442695
    %v858 = vpow.pop %v857
    %v859 = vsel %vm205, %v858, 0.0
    %860 = vadd.xlane.f32.xlu0 %v859
    %v861 = vpop.xlane.xlu0 %860
    %v862 = vrcp.pop %v861
    %v863 = vmul.f32 %v858, %v862
    %864 = vrot.lane.b32.xlu0 %v747, 48
    %v865 = vpop.permute.xlu0 %864
    %v868 = vsel %vm205, %v863, 0
    %870 = vmatpush.msra.mxu0 0.0
    %871 = vmatpush.msra.mxu0 0.0
    %872 = vmatpush.msra.mxu0 0.0
    %873 = vmatpush.msra.mxu0 0.0
    %874 = vmatpush.msra.mxu0 0.0
    %875 = vmatpush.msra.mxu0 0.0
    %876 = vmatpush.msra.mxu0 0.0
    %877 = vmatpush.msra.mxu0 0.0
    %878 = vmatpush.msra.mxu0 0.0
    %879 = vmatpush.msra.mxu0 0.0
    %880 = vmatpush.msra.mxu0 0.0
    %881 = vmatpush.msra.mxu0 0.0
    %882 = vmatpush.msra.mxu0 0.0
    %883 = vmatpush.msra.mxu0 0.0
    %884 = vmatpush.msra.mxu0 0.0
    %885 = vmatpush.msra.mxu0 %v865
    %886 = vmatmul.f32.gmra.mxu0 %v868
    %v887 = vpop.f32.mrf.mxu0
    %v888 = vadd.f32 0.0, %v887
    %889 = vdwg.mxu0
    %891 = vrot.lane.b32.xlu0 %v888, 16
    %v892 = vpop.permute.xlu0 %891
    %894 = vst.msk [vmem:[#allocation2] sm:$0xff] %vm315, %v892
    %v895 = vld [vmem:[%s317] sm:$0x1]
    %897 = vrot.lane.b32.xlu0 %v750, 96
    %v898 = vpop.permute.xlu0 %897
    %v899 = vsel %vm175, %v750, 0
    %v901 = vsel %vm175, %v898, 0
    %903 = vmatpush.xpose.msra.mxu0 0.0
    %904 = vmatpush.xpose.msra.mxu0 0.0
    %905 = vmatpush.xpose.msra.mxu0 0.0
    %906 = vmatpush.xpose.msra.mxu0 0.0
    %907 = vmatpush.xpose.msra.mxu0 0.0
    %908 = vmatpush.xpose.msra.mxu0 0.0
    %909 = vmatpush.xpose.msra.mxu0 0.0
    %910 = vmatpush.xpose.msra.mxu0 0.0
    %911 = vmatpush.xpose.msra.mxu0 0.0
    %912 = vmatpush.xpose.msra.mxu0 0.0
    %913 = vmatpush.xpose.msra.mxu0 0.0
    %914 = vmatpush.xpose.msra.mxu0 0.0
    %915 = vmatpush.xpose.msra.mxu0 0.0
    %916 = vmatpush.xpose.msra.mxu0 0.0
    %917 = vmatpush.xpose.msra.mxu0 0.0
    %918 = vmatpush.xpose.msra.mxu0 %v901
    %919 = vmatmul.f32.gmra.mxu0 %v899
    %v920 = vpop.f32.mrf.mxu0
    %v921 = vadd.f32 0.0, %v920
    %922 = vdwg.mxu0
    %v923 = vmul.f32 %v921, 0.25
    %v925 = vperm.slane %v895, 0
    %v927 = vadd.f32 %v923, %v925
    %v928 = vsel %vm205, %v927, -inf
    %929 = vmax.xlane.f32.xlu0 %v928
    %v930 = vpop.xlane.xlu0 %929
    %v931 = vsub.f32 %v927, %v930
    %v932 = vmul.f32 %v931, 1.442695
    %v933 = vpow.pop %v932
    %v934 = vsel %vm205, %v933, 0.0
    %935 = vadd.xlane.f32.xlu0 %v934
    %v936 = vpop.xlane.xlu0 %935
    %v937 = vrcp.pop %v936
    %v938 = vmul.f32 %v933, %v937
    %939 = vrot.lane.b32.xlu0 %v750, 64
    %v940 = vpop.permute.xlu0 %939
    %v943 = vsel %vm205, %v938, 0
    %945 = vmatpush.msra.mxu0 0.0
    %946 = vmatpush.msra.mxu0 0.0
    %947 = vmatpush.msra.mxu0 0.0
    %948 = vmatpush.msra.mxu0 0.0
    %949 = vmatpush.msra.mxu0 0.0
    %950 = vmatpush.msra.mxu0 0.0
    %951 = vmatpush.msra.mxu0 0.0
    %952 = vmatpush.msra.mxu0 0.0
    %953 = vmatpush.msra.mxu0 0.0
    %954 = vmatpush.msra.mxu0 0.0
    %955 = vmatpush.msra.mxu0 0.0
    %956 = vmatpush.msra.mxu0 0.0
    %957 = vmatpush.msra.mxu0 0.0
    %958 = vmatpush.msra.mxu0 0.0
    %959 = vmatpush.msra.mxu0 0.0
    %960 = vmatpush.msra.mxu0 %v940
    %961 = vmatmul.f32.gmra.mxu0 %v943
    %v962 = vpop.f32.mrf.mxu0
    %v963 = vadd.f32 0.0, %v962
    %964 = vdwg.mxu0
    %965 = vst.msk [vmem:[#allocation2 + $0x8] sm:$0xff] %vm175, %v963
    %966 = vrot.lane.b32.xlu0 %v750, 112
    %v967 = vpop.permute.xlu0 %966
    %968 = vrot.lane.b32.xlu0 %v750, 80
    %v969 = vpop.permute.xlu0 %968
    %v970 = vsel %vm175, %v967, 0
    %v972 = vsel %vm175, %v969, 0
    %974 = vmatpush.xpose.msra.mxu0 0.0
    %975 = vmatpush.xpose.msra.mxu0 0.0
    %976 = vmatpush.xpose.msra.mxu0 0.0
    %977 = vmatpush.xpose.msra.mxu0 0.0
    %978 = vmatpush.xpose.msra.mxu0 0.0
    %979 = vmatpush.xpose.msra.mxu0 0.0
    %980 = vmatpush.xpose.msra.mxu0 0.0
    %981 = vmatpush.xpose.msra.mxu0 0.0
    %982 = vmatpush.xpose.msra.mxu0 0.0
    %983 = vmatpush.xpose.msra.mxu0 0.0
    %984 = vmatpush.xpose.msra.mxu0 0.0
    %985 = vmatpush.xpose.msra.mxu0 0.0
    %986 = vmatpush.xpose.msra.mxu0 0.0
    %987 = vmatpush.xpose.msra.mxu0 0.0
    %988 = vmatpush.xpose.msra.mxu0 0.0
    %989 = vmatpush.xpose.msra.mxu0 %v972
    %990 = vmatmul.f32.gmra.mxu0 %v970
    %v991 = vpop.f32.mrf.mxu0
    %v992 = vadd.f32 0.0, %v991
    %993 = vdwg.mxu0
    %v994 = vmul.f32 %v992, 0.25
    %v995 = vadd.f32 %v994, %v925
    %v996 = vsel %vm205, %v995, -inf
    %997 = vmax.xlane.f32.xlu0 %v996
    %v998 = vpop.xlane.xlu0 %997
    %v999 = vsub.f32 %v995, %v998
    %v1000 = vmul.f32 %v999, 1.442695
    %v1001 = vpow.pop %v1000
    %v1002 = vsel %vm205, %v1001, 0.0
    %1003 = vadd.xlane.f32.xlu0 %v1002
    %v1004 = vpop.xlane.xlu0 %1003
    %v1005 = vrcp.pop %v1004
    %v1006 = vmul.f32 %v1001, %v1005
    %1007 = vrot.lane.b32.xlu0 %v750, 48
    %v1008 = vpop.permute.xlu0 %1007
    %v1011 = vsel %vm205, %v1006, 0
    %1013 = vmatpush.msra.mxu0 0.0
    %1014 = vmatpush.msra.mxu0 0.0
    %1015 = vmatpush.msra.mxu0 0.0
    %1016 = vmatpush.msra.mxu0 0.0
    %1017 = vmatpush.msra.mxu0 0.0
    %1018 = vmatpush.msra.mxu0 0.0
    %1019 = vmatpush.msra.mxu0 0.0
    %1020 = vmatpush.msra.mxu0 0.0
    %1021 = vmatpush.msra.mxu0 0.0
    %1022 = vmatpush.msra.mxu0 0.0
    %1023 = vmatpush.msra.mxu0 0.0
    %1024 = vmatpush.msra.mxu0 0.0
    %1025 = vmatpush.msra.mxu0 0.0
    %1026 = vmatpush.msra.mxu0 0.0
    %1027 = vmatpush.msra.mxu0 0.0
    %1028 = vmatpush.msra.mxu0 %v1008
    %1029 = vmatmul.f32.gmra.mxu0 %v1011
    %v1030 = vpop.f32.mrf.mxu0
    %v1031 = vadd.f32 0.0, %v1030
    %1032 = vdwg.mxu0
    %1034 = vrot.lane.b32.xlu0 %v1031, 16
    %v1035 = vpop.permute.xlu0 %1034
    %1037 = vst.msk [vmem:[#allocation2 + $0x8] sm:$0xff] %vm315, %v1035
    %v1038 = vld [vmem:[#allocation2] sm:$0xff]
    %v1039 = vld [vmem:[#allocation2 + $0x8] sm:$0xff]
    %s1040 = scalar_lea.vmem %s6, 32
    %v1041 = vld [vmem:[%s1040] sm:$0xff]
    %v1042 = vld [vmem:[%s1040 + $0x8] sm:$0xff]
    %v1043 = vld [vmem:[%s1040 + $0x10] sm:$0xff]
    %v1044 = vld [vmem:[%s1040 + $0x18] sm:$0xff]
    %s1045 = scalar_lea.vmem %s7, 1
    %v1046 = vld [vmem:[%s1045] sm:$0x1]
    %v1048 = vperm.slane %v1046, 0
    %v1051 = vsel %vm72, %v1038, 0
    %v1054 = vsel %vm72, %v1039, 0
    %1056 = vmatpush.msra.mxu0 0.0
    %1057 = vmatpush.msra.mxu0 0.0
    %1058 = vmatpush.msra.mxu0 0.0
    %1059 = vmatpush.msra.mxu0 0.0
    %1060 = vmatpush.msra.mxu0 0.0
    %1061 = vmatpush.msra.mxu0 0.0
    %1062 = vmatpush.msra.mxu0 0.0
    %1063 = vmatpush.msra.mxu0 0.0
    %1064 = vmatpush.msra.mxu0 0.0
    %1065 = vmatpush.msra.mxu0 0.0
    %1066 = vmatpush.msra.mxu0 0.0
    %1067 = vmatpush.msra.mxu0 0.0
    %1068 = vmatpush.msra.mxu0 %v1044
    %1069 = vmatpush.msra.mxu0 %v1043
    %1070 = vmatpush.msra.mxu0 %v1042
    %1071 = vmatpush.msra.mxu0 %v1041
    %1072 = vmatmul.f32.gmra.mxu0 %v1051
    %v1073 = vpop.f32.mrf.mxu0
    %v1074 = vadd.f32 %v1048, %v1073
    %1075 = vmatmul.f32.gmra.mxu0 %v1054
    %v1076 = vpop.f32.mrf.mxu0
    %v1077 = vadd.f32 %v1048, %v1076
    %1078 = vdwg.mxu0
    %v1079 = vadd.f32 %v1074, %v711
    %v1080 = vadd.f32 %v1077, %v712
    %s1081 = scalar_lea.vmem %s8, 1
    %v1082 = vld [vmem:[%s1081] sm:$0x1]
    %s1083 = scalar_lea.vmem %s9, 1
    %v1084 = vld [vmem:[%s1083] sm:$0x1]
    %v1085 = vsel %vm72, %v1079, 0.0
    %1086 = vadd.xlane.f32.xlu0 %v1085
    %v1087 = vpop.xlane.xlu0 %1086
    %v1088 = vsel %vm72, %v1080, 0.0
    %1089 = vadd.xlane.f32.xlu0 %v1088
    %v1090 = vpop.xlane.xlu0 %1089
    %v1091 = vmul.f32 %v1087, %v85
    %v1092 = vmul.f32 %v1090, %v85
    %v1093 = vsub.f32 %v1079, %v1091
    %v1094 = vsub.f32 %v1080, %v1092
    %v1095 = vmul.f32 %v1093, %v1093
    %v1096 = vmul.f32 %v1094, %v1094
    %v1097 = vsel %vm72, %v1095, 0.0
    %1098 = vadd.xlane.f32.xlu0 %v1097
    %v1099 = vpop.xlane.xlu0 %1098
    %v1100 = vsel %vm72, %v1096, 0.0
    %1101 = vadd.xlane.f32.xlu0 %v1100
    %v1102 = vpop.xlane.xlu0 %1101
    %v1103 = vmul.f32 %v1099, %v85
    %v1104 = vmul.f32 %v1102, %v85
    %v1105 = vadd.f32 %v1103, 1e-12
    %v1106 = vadd.f32 %v1104, 1e-12
    %v1107 = vrsqrt.pop %v1105
    %v1108 = vmul.f32 %v1107, %v1105
    %v1109 = vmul.f32 %v1108, %v1107
    %v1110 = vmul.f32 0.5, %v1109
    %v1111 = vsub.f32 1.5, %v1110
    %v1112 = vmul.f32 %v1107, %v1111
    %vm1113 = vweird.f32 %v1105
    %vm1114 = vweird.f32 %v1107
    %vm1115 = vmor %vm1113, %vm1114
    %v1116 = vsel %vm1115, %v1107, %v1112
    %v1117 = vrsqrt.pop %v1106
    %v1118 = vmul.f32 %v1117, %v1106
    %v1119 = vmul.f32 %v1118, %v1117
    %v1120 = vmul.f32 0.5, %v1119
    %v1121 = vsub.f32 1.5, %v1120
    %v1122 = vmul.f32 %v1117, %v1121
    %vm1123 = vweird.f32 %v1106
    %vm1124 = vweird.f32 %v1117
    %vm1125 = vmor %vm1123, %vm1124
    %v1126 = vsel %vm1125, %v1117, %v1122
    %v1127 = vmul.f32 %v1093, %v1116
    %v1128 = vmul.f32 %v1094, %v1126
    %v1130 = vperm.slane %v1082, 0
    %v1132 = vmul.f32 %v1127, %v1130
    %v1133 = vmul.f32 %v1128, %v1130
    %v1135 = vperm.slane %v1084, 0
    %v1137 = vadd.f32 %v1132, %v1135
    %v1138 = vadd.f32 %v1133, %v1135
    %s1139 = scalar_lea.vmem %s10, 32
    %v1140 = vld [vmem:[%s1139] sm:$0xff]
    %v1141 = vld [vmem:[%s1139 + $0x8] sm:$0xff]
    %v1142 = vld [vmem:[%s1139 + $0x10] sm:$0xff]
    %v1143 = vld [vmem:[%s1139 + $0x18] sm:$0xff]
    %s1144 = scalar_lea.vmem %s11, 1
    %v1145 = vld [vmem:[%s1144] sm:$0x1]
    %v1147 = vperm.slane %v1145, 0
    %v1150 = vsel %vm72, %v1137, 0
    %v1153 = vsel %vm72, %v1138, 0
    %1155 = vmatpush.msra.mxu0 0.0
    %1156 = vmatpush.msra.mxu0 0.0
    %1157 = vmatpush.msra.mxu0 0.0
    %1158 = vmatpush.msra.mxu0 0.0
    %1159 = vmatpush.msra.mxu0 0.0
    %1160 = vmatpush.msra.mxu0 0.0
    %1161 = vmatpush.msra.mxu0 0.0
    %1162 = vmatpush.msra.mxu0 0.0
    %1163 = vmatpush.msra.mxu0 0.0
    %1164 = vmatpush.msra.mxu0 0.0
    %1165 = vmatpush.msra.mxu0 0.0
    %1166 = vmatpush.msra.mxu0 0.0
    %1167 = vmatpush.msra.mxu0 %v1143
    %1168 = vmatpush.msra.mxu0 %v1142
    %1169 = vmatpush.msra.mxu0 %v1141
    %1170 = vmatpush.msra.mxu0 %v1140
    %1171 = vmatmul.f32.gmra.mxu0 %v1150
    %v1172 = vpop.f32.mrf.mxu0
    %v1173 = vadd.f32 %v1147, %v1172
    %1174 = vmatmul.f32.gmra.mxu0 %v1153
    %v1175 = vpop.f32.mrf.mxu0
    %v1176 = vadd.f32 %v1147, %v1175
    %1177 = vdwg.mxu0
    %v1178 = vmul.f32 %v1173, 0.5
    %v1179 = vmul.f32 %v1176, 0.5
    %v1180 = vmul.f32 %v1173, 0.044715
    %v1181 = vmul.f32 %v1176, 0.044715
    %v1182 = vmul.f32 %v1180, %v1173
    %v1183 = vmul.f32 %v1181, %v1176
    %v1184 = vmul.f32 %v1182, %v1173
    %v1185 = vmul.f32 %v1183, %v1176
    %v1186 = vadd.f32 %v1173, %v1184
    %v1187 = vadd.f32 %v1176, %v1185
    %v1188 = vmul.f32 %v1186, 0.7978846
    %v1189 = vmul.f32 %v1187, 0.7978846
    %v1190 = vtanh.pop %v1188
    %v1191 = vtanh.pop %v1189
    %v1192 = vadd.f32 %v1190, 1.0
    %v1193 = vadd.f32 %v1191, 1.0
    %v1194 = vmul.f32 %v1178, %v1192
    %v1195 = vmul.f32 %v1179, %v1193
    %s1196 = scalar_lea.vmem %s12, 64
    %v1197 = vld [vmem:[%s1196] sm:$0xff]
    %v1198 = vld [vmem:[%s1196 + $0x8] sm:$0xff]
    %v1199 = vld [vmem:[%s1196 + $0x10] sm:$0xff]
    %v1200 = vld [vmem:[%s1196 + $0x18] sm:$0xff]
    %v1201 = vld [vmem:[%s1196 + $0x20] sm:$0xff]
    %v1202 = vld [vmem:[%s1196 + $0x28] sm:$0xff]
    %v1203 = vld [vmem:[%s1196 + $0x30] sm:$0xff]
    %v1204 = vld [vmem:[%s1196 + $0x38] sm:$0xff]
    %s1205 = scalar_lea.vmem %s13, 1
    %v1206 = vld [vmem:[%s1205] sm:$0x1]
    %v1208 = vperm.slane %v1206, 0
    %v1211 = vsel %vm625, %v1194, 0
    %v1214 = vsel %vm625, %v1195, 0
    %1216 = vmatpush.msra.mxu0 0.0
    %1217 = vmatpush.msra.mxu0 0.0
    %1218 = vmatpush.msra.mxu0 0.0
    %1219 = vmatpush.msra.mxu0 0.0
    %1220 = vmatpush.msra.mxu0 0.0
    %1221 = vmatpush.msra.mxu0 0.0
    %1222 = vmatpush.msra.mxu0 0.0
    %1223 = vmatpush.msra.mxu0 0.0
    %1224 = vmatpush.msra.mxu0 %v1204
    %1225 = vmatpush.msra.mxu0 %v1203
    %1226 = vmatpush.msra.mxu0 %v1202
    %1227 = vmatpush.msra.mxu0 %v1201
    %1228 = vmatpush.msra.mxu0 %v1200
    %1229 = vmatpush.msra.mxu0 %v1199
    %1230 = vmatpush.msra.mxu0 %v1198
    %1231 = vmatpush.msra.mxu0 %v1197
    %1232 = vmatmul.f32.gmra.mxu0 %v1211
    %v1233 = vpop.f32.mrf.mxu0
    %v1234 = vadd.f32 %v1208, %v1233
    %1235 = vmatmul.f32.gmra.mxu0 %v1214
    %v1236 = vpop.f32.mrf.mxu0
    %v1237 = vadd.f32 %v1208, %v1236
    %1238 = vdwg.mxu0
    %v1239 = vadd.f32 %v1234, %v1137
    %v1240 = vadd.f32 %v1237, %v1138
    %s1241 = scalar_lea.vmem %s14, 1
    %v1242 = vld [vmem:[%s1241] sm:$0x1]
    %s1243 = scalar_lea.vmem %s15, 1
    %v1244 = vld [vmem:[%s1243] sm:$0x1]
    %v1245 = vsel %vm72, %v1239, 0.0
    %1246 = vadd.xlane.f32.xlu0 %v1245
    %v1247 = vpop.xlane.xlu0 %1246
    %v1248 = vsel %vm72, %v1240, 0.0
    %1249 = vadd.xlane.f32.xlu0 %v1248
    %v1250 = vpop.xlane.xlu0 %1249
    %v1251 = vmul.f32 %v1247, %v85
    %v1252 = vmul.f32 %v1250, %v85
    %v1253 = vsub.f32 %v1239, %v1251
    %v1254 = vsub.f32 %v1240, %v1252
    %v1255 = vmul.f32 %v1253, %v1253
    %v1256 = vmul.f32 %v1254, %v1254
    %v1257 = vsel %vm72, %v1255, 0.0
    %1258 = vadd.xlane.f32.xlu0 %v1257
    %v1259 = vpop.xlane.xlu0 %1258
    %v1260 = vsel %vm72, %v1256, 0.0
    %1261 = vadd.xlane.f32.xlu0 %v1260
    %v1262 = vpop.xlane.xlu0 %1261
    %v1263 = vmul.f32 %v1259, %v85
    %v1264 = vmul.f32 %v1262, %v85
    %v1265 = vadd.f32 %v1263, 1e-12
    %v1266 = vadd.f32 %v1264, 1e-12
    %v1267 = vrsqrt.pop %v1265
    %v1268 = vmul.f32 %v1267, %v1265
    %v1269 = vmul.f32 %v1268, %v1267
    %v1270 = vmul.f32 0.5, %v1269
    %v1271 = vsub.f32 1.5, %v1270
    %v1272 = vmul.f32 %v1267, %v1271
    %vm1273 = vweird.f32 %v1265
    %vm1274 = vweird.f32 %v1267
    %vm1275 = vmor %vm1273, %vm1274
    %v1276 = vsel %vm1275, %v1267, %v1272
    %v1277 = vrsqrt.pop %v1266
    %v1278 = vmul.f32 %v1277, %v1266
    %v1279 = vmul.f32 %v1278, %v1277
    %v1280 = vmul.f32 0.5, %v1279
    %v1281 = vsub.f32 1.5, %v1280
    %v1282 = vmul.f32 %v1277, %v1281
    %vm1283 = vweird.f32 %v1266
    %vm1284 = vweird.f32 %v1277
    %vm1285 = vmor %vm1283, %vm1284
    %v1286 = vsel %vm1285, %v1277, %v1282
    %v1287 = vmul.f32 %v1253, %v1276
    %v1288 = vmul.f32 %v1254, %v1286
    %v1290 = vperm.slane %v1242, 0
    %v1292 = vmul.f32 %v1287, %v1290
    %v1293 = vmul.f32 %v1288, %v1290
    %v1295 = vperm.slane %v1244, 0
    %v1297 = vadd.f32 %v1292, %v1295
    %v1298 = vadd.f32 %v1293, %v1295
    %v1299 = vld [vmem:[%s18] sm:$0xff]
    %v1300 = vld [vmem:[%s18 + $0x8] sm:$0xff]
    %v1301 = vld [vmem:[%s18 + $0x10] sm:$0xff]
    %v1302 = vld [vmem:[%s18 + $0x18] sm:$0xff]
    %v1303 = vld [vmem:[%s19] sm:$0x1]
    %v1305 = vperm.slane %v1303, 0
    %v1308 = vsel %vm72, %v1297, 0
    %v1311 = vsel %vm72, %v1298, 0
    %1313 = vmatpush.msra.mxu0 0.0
    %1314 = vmatpush.msra.mxu0 0.0
    %1315 = vmatpush.msra.mxu0 0.0
    %1316 = vmatpush.msra.mxu0 0.0
    %1317 = vmatpush.msra.mxu0 0.0
    %1318 = vmatpush.msra.mxu0 0.0
    %1319 = vmatpush.msra.mxu0 0.0
    %1320 = vmatpush.msra.mxu0 0.0
    %1321 = vmatpush.msra.mxu0 0.0
    %1322 = vmatpush.msra.mxu0 0.0
    %1323 = vmatpush.msra.mxu0 0.0
    %1324 = vmatpush.msra.mxu0 0.0
    %1325 = vmatpush.msra.mxu0 %v1302
    %1326 = vmatpush.msra.mxu0 %v1301
    %1327 = vmatpush.msra.mxu0 %v1300
    %1328 = vmatpush.msra.mxu0 %v1299
    %1329 = vmatmul.f32.gmra.mxu0 %v1308
    %v1330 = vpop.f32.mrf.mxu0
    %v1331 = vadd.f32 %v1305, %v1330
    %1332 = vmatmul.f32.gmra.mxu0 %v1311
    %v1333 = vpop.f32.mrf.mxu0
    %v1334 = vadd.f32 %v1305, %v1333
    %1335 = vdwg.mxu0
    %v1336 = vmax.f32 %v1331, 0.0
    %v1337 = vmax.f32 %v1334, 0.0
    %1338 = vst [vmem:[%s20] sm:$0xff] %v1336
    %1339 = vst [vmem:[%s20 + $0x8] sm:$0xff] %v1337
    %v1340 = vld [vmem:[%s16] sm:$0xff]
    %v1341 = vld [vmem:[%s16 + $0x8] sm:$0xff]
    %v1342 = vld [vmem:[%s16 + $0x10] sm:$0xff]
    %v1343 = vld [vmem:[%s16 + $0x18] sm:$0xff]
    %v1344 = vld [vmem:[%s17] sm:$0x1]
    %1345 = vmatpush.msra.mxu0 0.0
    %1346 = vmatpush.msra.mxu0 0.0
    %1347 = vmatpush.msra.mxu0 0.0
    %1348 = vmatpush.msra.mxu0 0.0
    %1349 = vmatpush.msra.mxu0 0.0
    %1350 = vmatpush.msra.mxu0 0.0
    %1351 = vmatpush.msra.mxu0 0.0
    %1352 = vmatpush.msra.mxu0 0.0
    %1353 = vmatpush.msra.mxu0 0.0
    %1354 = vmatpush.msra.mxu0 0.0
    %1355 = vmatpush.msra.mxu0 0.0
    %1356 = vmatpush.msra.mxu0 0.0
    %1357 = vmatpush.msra.mxu0 %v1343
    %1358 = vmatpush.msra.mxu0 %v1342
    %1359 = vmatpush.msra.mxu0 %v1341
    %1360 = vmatpush.msra.mxu0 %v1340
    %1361 = vmatmul.f32.gmra.mxu0 %v1308
    %v1362 = vpop.f32.mrf.mxu0
    %v1363 = vadd.f32 %v1344, %v1362
    %1364 = vdwg.mxu0
    %v1365 = vtanh.pop %v1363
    %1366 = vst [vmem:[#allocation3] sm:$0x1] %v1365
    %v1367 = vld [vmem:[%s16] sm:$0xff]
    %v1368 = vld [vmem:[%s16 + $0x8] sm:$0xff]
    %v1369 = vld [vmem:[%s16 + $0x10] sm:$0xff]
    %v1370 = vld [vmem:[%s16 + $0x18] sm:$0xff]
    %v1371 = vld [vmem:[%s17] sm:$0x1]
    %1372 = vmatpush.msra.mxu0 0.0
    %1373 = vmatpush.msra.mxu0 0.0
    %1374 = vmatpush.msra.mxu0 0.0
    %1375 = vmatpush.msra.mxu0 0.0
    %1376 = vmatpush.msra.mxu0 0.0
    %1377 = vmatpush.msra.mxu0 0.0
    %1378 = vmatpush.msra.mxu0 0.0
    %1379 = vmatpush.msra.mxu0 0.0
    %1380 = vmatpush.msra.mxu0 0.0
    %1381 = vmatpush.msra.mxu0 0.0
    %1382 = vmatpush.msra.mxu0 0.0
    %1383 = vmatpush.msra.mxu0 0.0
    %1384 = vmatpush.msra.mxu0 %v1370
    %1385 = vmatpush.msra.mxu0 %v1369
    %1386 = vmatpush.msra.mxu0 %v1368
    %1387 = vmatpush.msra.mxu0 %v1367
    %1388 = vmatmul.f32.gmra.mxu0 %v1311
    %v1389 = vpop.f32.mrf.mxu0
    %v1390 = vadd.f32 %v1371, %v1389
    %1391 = vdwg.mxu0
    %v1392 = vtanh.pop %v1390
    %1393 = vst [vmem:[#allocation3 + $0x1] sm:$0x1] %v1392
    // Predicated region
    $region82: #{bert_word_forward.1} parent=1 // pred_check
      _
    $region83: #{bert_word_forward.1} parent=1 // pred_check_branch
      %1395 = sbr.rel (0) target = $region85
    $region84: #{bert_word_forward.1} parent=1 // pred_region
      _
    $region85: #{bert_word_forward.1} parent=1 // pred_fallthru
      _
    // Predicated region
    $region86: #{bert_word_forward.1} parent=1 // pred_check
      _
    $region87: #{bert_word_forward.1} parent=1 // pred_check_branch
      %1397 = sbr.rel (0) target = $region89
    $region88: #{bert_word_forward.1} parent=1 // pred_region
      %1399 = vsyncadd [#allocation4], 0
      %s1401 = sshll.u32 [#allocation3], 4
      %s1402 = int_to_ptr.vmem [resolvable:$true] %s1401
      %s1403 = sshll.u32 %s21, 4
      %s1404 = int_to_ptr.hbm [resolvable:$true] %s1403
      %1406 = dma.vmem_to_hbm [thread:$0]  %s1402, 32, %s1404, [#allocation4]
    $region89: #{bert_word_forward.1} parent=1 // pred_fallthru
      _
    // Predicated region
    $region90: #{bert_word_forward.1} parent=1 // pred_check
      _
    $region91: #{bert_word_forward.1} parent=1 // pred_check_branch
      %1408 = sbr.rel (0) target = $region93
    $region92: #{bert_word_forward.1} parent=1 // pred_region
      _
    $region93: #{bert_word_forward.1} parent=1 // pred_fallthru
      _
    // Predicated region
    $region94: #{bert_word_forward.1} parent=1 // pred_check
      _
    $region95: #{bert_word_forward.1} parent=1 // pred_check_branch
      %1410 = sbr.rel (0) target = $region97
    $region96: #{bert_word_forward.1} parent=1 // pred_region
      %1412 = dma.done [#allocation4], 32
    $region97: #{bert_word_forward.1} parent=1 // pred_fallthru
      _
    %1413 = vsyncpa [#allocation4], 1

</llo_original>
